<compile_context>
chip_gen: v5e
topology: v5e:2x2
jax: 0.10.0
libtpu: 0.0.40
codegen_flags: <defaults>
</compile_context>

<pallas_src>
import functools

import jax
import jax.numpy as jnp
from jax.experimental import pallas as pl
from jax.experimental.pallas import tpu as pltpu


def _round_up(x, m):
    return ((x + m - 1) // m) * m


def _pad_to(a, shape):
    pads = [(0, t - s) for s, t in zip(a.shape, shape)]
    if any(p[1] for p in pads):
        a = jnp.pad(a, pads)
    return a


def _netg2_kernel(z_ref, f_ref, w1z_ref, w1f_ref, b1_ref, w2_ref, b2_ref,
                  out_ref, acc_ref):
    """One (batch_tile, h_chunk) step of: leaky_relu(x@W1+b1) @ W2 + b2."""
    k = pl.program_id(1)

    @pl.when(k == 0)
    def _():
        acc_ref[...] = jnp.zeros_like(acc_ref)

    # First layer, K split across z / feature (replaces the torch.cat).
    h = jnp.dot(z_ref[...], w1z_ref[...], preferred_element_type=jnp.float32)
    h = h + jnp.dot(f_ref[...], w1f_ref[...],
                    preferred_element_type=jnp.float32)
    h = h + b1_ref[...].astype(jnp.float32)          # broadcast (1, bh)
    # nn.LeakyReLU() default negative_slope = 0.01
    h = jnp.where(h > 0, h, 0.01 * h)

    # Second layer: accumulate this H chunk's contribution.
    acc_ref[...] += jnp.dot(h.astype(w2_ref.dtype), w2_ref[...],
                            preferred_element_type=jnp.float32)

    @pl.when(k == pl.num_programs(1) - 1)
    def _():
        out_ref[...] = (acc_ref[...] +
                        b2_ref[...].astype(jnp.float32)).astype(out_ref.dtype)


@functools.partial(jax.jit, static_argnames=("z_dim", "batch_tile", "h_tile"))
def netg2_forward(z, feature, w1, b1, w2, b2, *, z_dim,
                  batch_tile=256, h_tile=512):
    """z: (B, z_dim), feature: (B, X), w1: (z_dim+X, H), b1: (1, H),
    w2: (H, D_out), b2: (1, D_out).  Returns (B, D_out) float32."""
    B, Zd = z.shape
    _, Xd = feature.shape
    Din, H = w1.shape
    Dout = w2.shape[1]
    assert Zd == z_dim and Din == Zd + Xd

    # Split W1 for the fused concat, cast everything streamed to bf16.
    bf = lambda a: a.astype(jnp.bfloat16)
    w1z, w1f = bf(w1[:Zd]), bf(w1[Zd:])
    zb, fb, b1b, w2b, b2b = bf(z), bf(feature), bf(b1), bf(w2), bf(b2)

    # Tile sizes & padded (lane/sublane aligned) dims.
    bm = min(batch_tile, _round_up(B, 8))          # multiple of 8
    Bp = _round_up(B, bm)
    bh = min(h_tile, _round_up(H, 128))            # multiple of 128
    Hp = _round_up(H, bh)
    Dp = _round_up(Dout, 128)

    # Zero padding: padded H columns get b1=0 -> h=0 -> leaky=0, and the
    # padded W2 rows are 0, so they contribute nothing to the output.
    zb = _pad_to(zb, (Bp, Zd))
    fb = _pad_to(fb, (Bp, Xd))
    w1z = _pad_to(w1z, (Zd, Hp))
    w1f = _pad_to(w1f, (Xd, Hp))
    b1b = _pad_to(b1b, (1, Hp))
    w2b = _pad_to(w2b, (Hp, Dp))
    b2b = _pad_to(b2b, (1, Dp))

    # Explicit scoped-VMEM budget: ~2x the double-buffered per-step working
    # set, clamped to [32 MiB, 64 MiB] so it is valid on v5e/v6e/v7x alike.
    step_bytes = (2 * (bm * Zd + bm * Xd + Zd * bh + Xd * bh + bh
                       + bh * Dp + Dp) * 2          # bf16 inputs, dbl-buffered
                  + 2 * bm * Dp * 4                 # f32 output, dbl-buffered
                  + bm * Dp * 4)                    # f32 accumulator scratch
    vmem_limit = int(min(64 * 2**20, max(32 * 2**20, 2 * step_bytes)))

    grid = (Bp // bm, Hp // bh)

    out = pl.pallas_call(
        _netg2_kernel,
        out_shape=jax.ShapeDtypeStruct((Bp, Dp), jnp.float32),
        grid_spec=pltpu.PrefetchScalarGridSpec(
            num_scalar_prefetch=0,
            grid=grid,
            in_specs=[
                pl.BlockSpec((bm, Zd), lambda i, k: (i, 0)),   # z tile
                pl.BlockSpec((bm, Xd), lambda i, k: (i, 0)),   # feature tile
                pl.BlockSpec((Zd, bh), lambda i, k: (0, k)),   # W1[:Zd] chunk
                pl.BlockSpec((Xd, bh), lambda i, k: (0, k)),   # W1[Zd:] chunk
                pl.BlockSpec((1, bh), lambda i, k: (0, k)),    # b1 chunk
                pl.BlockSpec((bh, Dp), lambda i, k: (k, 0)),   # W2 chunk
                pl.BlockSpec((1, Dp), lambda i, k: (0, 0)),    # b2
            ],
            out_specs=pl.BlockSpec((bm, Dp), lambda i, k: (i, 0)),
            scratch_shapes=[pltpu.VMEM((bm, Dp), jnp.float32)],
        ),
        compiler_params=pltpu.CompilerParams(
            dimension_semantics=("parallel", "arbitrary"),
            vmem_limit_bytes=vmem_limit,
        ),
    )(zb, fb, w1z, w1f, b1b, w2b, b2b)

    return out[:B, :Dout]


def init_linear_params(key, fan_in, fan_out, dtype=jnp.float32):
    """nn.Linear default init: U(-1/sqrt(fan_in), +1/sqrt(fan_in))."""
    kw, kb = jax.random.split(key)
    bound = 1.0 / jnp.sqrt(jnp.asarray(fan_in, dtype))
    w = jax.random.uniform(kw, (fan_in, fan_out), dtype, -bound, bound)
    b = jax.random.uniform(kb, (1, fan_out), dtype, -bound, bound)
    return w, b


def reference_forward(z, feature, w1, b1, w2, b2):
    """Pure-JAX reference mimicking the kernel's bf16/f32 mixed precision."""
    bf = lambda a: a.astype(jnp.bfloat16)
    x = jnp.concatenate([bf(z), bf(feature)], axis=1)
    h = jnp.dot(x, bf(w1), preferred_element_type=jnp.float32)
    h = h + bf(b1).astype(jnp.float32)
    h = jnp.where(h > 0, h, 0.01 * h)
    o = jnp.dot(h.astype(jnp.bfloat16), bf(w2),
                preferred_element_type=jnp.float32)
    return o + bf(b2).astype(jnp.float32)


if __name__ == "__main__":
    # Small shapes consistent with the module (module defaults: X_dim=3584,
    # z_dim=100, h_dim=4086, rdc_text_dim=1000).  z_dim kept at 100; the other
    # dims are scaled down and deliberately NOT 128-aligned / tile-aligned so
    # the padding + multi-step accumulation paths are exercised.
    B = 100            # batch
    Z_DIM = 100        # noise dim (matches module)
    X_DIM = 384        # feature dim (scaled from 3584)
    H_DIM = 500        # hidden dim (scaled from 4086)
    RDC_TEXT_DIM = 250 # output dim (scaled from 1000)

    key = jax.random.PRNGKey(0)
    k_z, k_f, k_l1, k_l2 = jax.random.split(key, 4)

    z = jax.random.normal(k_z, (B, Z_DIM), jnp.float32)
    feature = jax.random.normal(k_f, (B, X_DIM), jnp.float32)

    w1, b1 = init_linear_params(k_l1, Z_DIM + X_DIM, H_DIM)
    w2, b2 = init_linear_params(k_l2, H_DIM, RDC_TEXT_DIM)

    # Small tiles here force a (2 batch-tiles x 2 H-chunks) grid for testing;
    # production defaults (batch_tile=256, h_tile=512) are used otherwise.
    out = netg2_forward(z, feature, w1, b1, w2, b2,
                        z_dim=Z_DIM, batch_tile=64, h_tile=256)
    out = jax.block_until_ready(out)

    ref = reference_forward(z, feature, w1, b1, w2, b2)
    assert out.shape == (B, RDC_TEXT_DIM)
    assert jnp.allclose(out, ref, atol=1e-2, rtol=1e-2), "mismatch vs. reference"

    print("KERNEL_OK")
</pallas_src>

<mosaic_0001>
module attributes {stable_mosaic.version = 11 : i64} {
  func.func @_netg2_kernel(%arg0: i32, %arg1: i32, %arg2: memref<64x100xbf16, #tpu.memory_space<vmem>>, %arg3: memref<64x384xbf16, #tpu.memory_space<vmem>>, %arg4: memref<100x256xbf16, #tpu.memory_space<vmem>>, %arg5: memref<384x256xbf16, #tpu.memory_space<vmem>>, %arg6: memref<1x256xbf16, #tpu.memory_space<vmem>>, %arg7: memref<256x256xbf16, #tpu.memory_space<vmem>>, %arg8: memref<1x256xbf16, #tpu.memory_space<vmem>>, %arg9: memref<64x256xf32, #tpu.memory_space<vmem>>, %arg10: memref<64x256xf32, #tpu.memory_space<vmem>>) attributes {dimension_semantics = [#tpu.dimension_semantics<parallel>, #tpu.dimension_semantics<arbitrary>], iteration_bounds = array<i64: 2, 2>, scalar_prefetch = 0 : i64, scratch_operands = 1 : i64, tpu.core_type = #tpu.core_type<tc>, window_params = [{transform_indices = @transform_0, window_bounds = array<i64: 64, 100>}, {transform_indices = @transform_1, window_bounds = array<i64: 64, 384>}, {transform_indices = @transform_2, window_bounds = array<i64: 100, 256>}, {transform_indices = @transform_3, window_bounds = array<i64: 384, 256>}, {transform_indices = @transform_4, window_bounds = array<i64: 1, 256>}, {transform_indices = @transform_5, window_bounds = array<i64: 256, 256>}, {pipeline_mode = #tpu.pipeline_mode<synchronous>, transform_indices = @transform_6, window_bounds = array<i64: 1, 256>}, {transform_indices = @transform_7, window_bounds = array<i64: 64, 256>}]} {
    %c0_i32 = arith.constant 0 : i32
    %0 = arith.cmpi eq, %arg1, %c0_i32 : i32
    %1 = arith.extui %0 : i1 to i32
    %c0_i32_0 = arith.constant 0 : i32
    %2 = arith.cmpi ne, %1, %c0_i32_0 : i32
    scf.if %2 {
      %cst_21 = arith.constant 0.000000e+00 : f32
      %28 = vector.broadcast %cst_21 : f32 to vector<64x256xf32>
      %c0_22 = arith.constant 0 : index
      %c0_23 = arith.constant 0 : index
      %29 = vector.load %arg10[%c0_22, %c0_23] : memref<64x256xf32, #tpu.memory_space<vmem>>, vector<64x256xf32>
      tpu.vector_store %arg10[%c0_22, %c0_23], %28 {strides = array<i32>} : memref<64x256xf32, #tpu.memory_space<vmem>>, vector<64x256xf32>,
    } else {
    }
    %c0 = arith.constant 0 : index
    %c0_1 = arith.constant 0 : index
    %3 = vector.load %arg2[%c0, %c0_1] : memref<64x100xbf16, #tpu.memory_space<vmem>>, vector<64x100xbf16>
    %c0_2 = arith.constant 0 : index
    %c0_3 = arith.constant 0 : index
    %4 = vector.load %arg4[%c0_2, %c0_3] : memref<100x256xbf16, #tpu.memory_space<vmem>>, vector<100x256xbf16>
    %cst = arith.constant dense<0.000000e+00> : vector<64x256xf32>
    %5 = tpu.matmul %3, %4, %cst {dimension_numbers = #tpu.dot_dimension_numbers<[1], [0], [0], [1], [0, 0, 1, 1], [], []>} : vector<64x100xbf16>, vector<100x256xbf16>, vector<64x256xf32> -> vector<64x256xf32>
    %c0_4 = arith.constant 0 : index
    %c0_5 = arith.constant 0 : index
    %6 = vector.load %arg3[%c0_4, %c0_5] : memref<64x384xbf16, #tpu.memory_space<vmem>>, vector<64x384xbf16>
    %c0_6 = arith.constant 0 : index
    %c0_7 = arith.constant 0 : index
    %7 = vector.load %arg5[%c0_6, %c0_7] : memref<384x256xbf16, #tpu.memory_space<vmem>>, vector<384x256xbf16>
    %cst_8 = arith.constant dense<0.000000e+00> : vector<64x256xf32>
    %8 = tpu.matmul %6, %7, %cst_8 {dimension_numbers = #tpu.dot_dimension_numbers<[1], [0], [0], [1], [0, 0, 1, 1], [], []>} : vector<64x384xbf16>, vector<384x256xbf16>, vector<64x256xf32> -> vector<64x256xf32>
    %9 = arith.addf %5, %8 : vector<64x256xf32>
    %c0_9 = arith.constant 0 : index
    %c0_10 = arith.constant 0 : index
    %10 = vector.load %arg6[%c0_9, %c0_10] : memref<1x256xbf16, #tpu.memory_space<vmem>>, vector<1x256xbf16>
    %11 = arith.extf %10 : vector<1x256xbf16> to vector<1x256xf32>
    %12 = vector.broadcast %11 : vector<1x256xf32> to vector<64x256xf32>
    %13 = arith.addf %9, %12 : vector<64x256xf32>
    %cst_11 = arith.constant 0.000000e+00 : f32
    %14 = vector.broadcast %cst_11 : f32 to vector<64x256xf32>
    %15 = arith.cmpf ogt, %13, %14 : vector<64x256xf32>
    %cst_12 = arith.constant 0.00999999977 : f32
    %16 = vector.broadcast %cst_12 : f32 to vector<64x256xf32>
    %17 = arith.mulf %16, %13 : vector<64x256xf32>
    %18 = arith.select %15, %13, %17 : vector<64x256xi1>, vector<64x256xf32>
    %c0_13 = arith.constant 0 : index
    %c0_14 = arith.constant 0 : index
    %19 = vector.load %arg10[%c0_13, %c0_14] : memref<64x256xf32, #tpu.memory_space<vmem>>, vector<64x256xf32>
    %20 = arith.truncf %18 : vector<64x256xf32> to vector<64x256xbf16>
    %c0_15 = arith.constant 0 : index
    %c0_16 = arith.constant 0 : index
    %21 = vector.load %arg7[%c0_15, %c0_16] : memref<256x256xbf16, #tpu.memory_space<vmem>>, vector<256x256xbf16>
    %cst_17 = arith.constant dense<0.000000e+00> : vector<64x256xf32>
    %22 = tpu.matmul %20, %21, %cst_17 {dimension_numbers = #tpu.dot_dimension_numbers<[1], [0], [0], [1], [0, 0, 1, 1], [], []>} : vector<64x256xbf16>, vector<256x256xbf16>, vector<64x256xf32> -> vector<64x256xf32>
    %23 = arith.addf %19, %22 : vector<64x256xf32>
    %c0_18 = arith.constant 0 : index
    %c0_19 = arith.constant 0 : index
    %24 = vector.load %arg10[%c0_18, %c0_19] : memref<64x256xf32, #tpu.memory_space<vmem>>, vector<64x256xf32>
    tpu.vector_store %arg10[%c0_18, %c0_19], %23 {strides = array<i32>} : memref<64x256xf32, #tpu.memory_space<vmem>>, vector<64x256xf32>,
    %c1_i32 = arith.constant 1 : i32
    %25 = arith.cmpi eq, %arg1, %c1_i32 : i32
    %26 = arith.extui %25 : i1 to i32
    %c0_i32_20 = arith.constant 0 : i32
    %27 = arith.cmpi ne, %26, %c0_i32_20 : i32
    scf.if %27 {
      %c0_21 = arith.constant 0 : index
      %c0_22 = arith.constant 0 : index
      %28 = vector.load %arg10[%c0_21, %c0_22] : memref<64x256xf32, #tpu.memory_space<vmem>>, vector<64x256xf32>
      %c0_23 = arith.constant 0 : index
      %c0_24 = arith.constant 0 : index
      %29 = vector.load %arg8[%c0_23, %c0_24] : memref<1x256xbf16, #tpu.memory_space<vmem>>, vector<1x256xbf16>
      %30 = arith.extf %29 : vector<1x256xbf16> to vector<1x256xf32>
      %31 = vector.broadcast %30 : vector<1x256xf32> to vector<64x256xf32>
      %32 = arith.addf %28, %31 : vector<64x256xf32>
      %c0_25 = arith.constant 0 : index
      %c0_26 = arith.constant 0 : index
      %33 = vector.load %arg9[%c0_25, %c0_26] : memref<64x256xf32, #tpu.memory_space<vmem>>, vector<64x256xf32>
      tpu.vector_store %arg9[%c0_25, %c0_26], %32 {strides = array<i32>} : memref<64x256xf32, #tpu.memory_space<vmem>>, vector<64x256xf32>,
    } else {
    }
    return
  }
  func.func @transform_0(%arg0: i32, %arg1: i32) -> (i32, i32) {
    %c0_i32 = arith.constant 0 : i32
    %c0_i32_0 = arith.constant 0 : i32
    return %arg0, %c0_i32 : i32, i32
  }
  func.func @transform_1(%arg0: i32, %arg1: i32) -> (i32, i32) {
    %c0_i32 = arith.constant 0 : i32
    %c0_i32_0 = arith.constant 0 : i32
    return %arg0, %c0_i32 : i32, i32
  }
  func.func @transform_2(%arg0: i32, %arg1: i32) -> (i32, i32) {
    %c0_i32 = arith.constant 0 : i32
    %c0_i32_0 = arith.constant 0 : i32
    return %c0_i32, %arg1 : i32, i32
  }
  func.func @transform_3(%arg0: i32, %arg1: i32) -> (i32, i32) {
    %c0_i32 = arith.constant 0 : i32
    %c0_i32_0 = arith.constant 0 : i32
    return %c0_i32, %arg1 : i32, i32
  }
  func.func @transform_4(%arg0: i32, %arg1: i32) -> (i32, i32) {
    %c0_i32 = arith.constant 0 : i32
    %c0_i32_0 = arith.constant 0 : i32
    return %c0_i32, %arg1 : i32, i32
  }
  func.func @transform_5(%arg0: i32, %arg1: i32) -> (i32, i32) {
    %c0_i32 = arith.constant 0 : i32
    %c0_i32_0 = arith.constant 0 : i32
    return %arg1, %c0_i32 : i32, i32
  }
  func.func @transform_6(%arg0: i32, %arg1: i32) -> (i32, i32) {
    %c0_i32 = arith.constant 0 : i32
    %c0_i32_0 = arith.constant 0 : i32
    %c0_i32_1 = arith.constant 0 : i32
    return %c0_i32, %c0_i32_0 : i32, i32
  }
  func.func @transform_7(%arg0: i32, %arg1: i32) -> (i32, i32) {
    %c0_i32 = arith.constant 0 : i32
    %c0_i32_0 = arith.constant 0 : i32
    return %arg0, %c0_i32 : i32, i32
  }
}

</mosaic_0001>

<llo_original>
// kernel: netg2_forward.1
$region0: #{netg2_forward.1}
  #allocation0 [shape = 'u32[]', space=smem, size = 0x4, offset = 0x4, fixed_abs, tag = 'smem constant byte address 0x4 - core index']
  #allocation1 [shape = 'u32[72,128]{1,0:T(1,128)}', space=vmem, size = 0x9000, scoped, tag = 'internal scratch']
  #allocation2 [shape = 'f32[64,256]{1,0:T(8,128)}', space=vmem, size = 0x10000, scoped, tag = 'scratch operand']
  %s0 = inlined_call_operand.vmem [shape: bf16[128,100], index: 0, kind: input, shape index: {}]
  %s1 = inlined_call_operand.vmem [shape: bf16[128,384], index: 1, kind: input, shape index: {}]
  %s2 = inlined_call_operand.vmem [shape: bf16[100,512], index: 2, kind: input, shape index: {}]
  %s3 = inlined_call_operand.vmem [shape: bf16[384,512], index: 3, kind: input, shape index: {}]
  %s4 = inlined_call_operand.vmem [shape: bf16[1,512], index: 4, kind: input, shape index: {}]
  %s5 = inlined_call_operand.vmem [shape: bf16[512,256], index: 5, kind: input, shape index: {}]
  %s6 = inlined_call_operand.vmem [shape: bf16[1,256], index: 6, kind: input, shape index: {}]
  %s7 = inlined_call_operand.vmem [shape: f32[128,256], index: 7, kind: output, shape index: {}]
  %s8 = sld [smem:[#allocation0]]
  $region145: #{netg2_forward.1} parent=0
    _
  %s10 = ssub.s32 1, %s8
  %s11 = scalar_select 0, %s10, %s8
  $region1: #{netg2_forward.1} parent=0
    #allocation3 [shape = 'u8[106496]{0}', space=vmem, size = 0x1a000, scoped, tag = 'input window, operand 2']
    #allocation4 [shape = 'u8[393216]{0}', space=vmem, size = 0x60000, scoped, tag = 'input window, operand 3']
    loop: start=0, step=1, limit=6
    $region2: #{netg2_forward.1} parent=1 // loop_pre_header
      _
    $region3: #{netg2_forward.1} parent=1 // loop_header
      %s13 = sphi 0, %s17
      %p14 = scmp.ge.s32.totalorder %s13, 6
      %s20 = sphi 0, %s32
      %s21 = sphi 0, %s28
      %s22 = sphi 0, %s20
      %s23 = sphi 0, %s21
      %s24 = sphi 0, %s22
      %s25 = sphi 0, %s23
      %s35 = sphi 0, %s37
      %s38 = sphi 0, %s35
      %s39 = sphi 0, %s38
      %s55 = sphi 0, %s39
      %s61 = sphi 0, %s63
      %s64 = sphi 0, %s61
      %s65 = sphi 0, %s64
      %s81 = sphi 0, %s65
      %s87 = sphi 0, %s89
      %s90 = sphi 0, %s87
      %s91 = sphi 0, %s90
      %s107 = sphi 0, %s91
      %s113 = sphi 0, %s115
      %s116 = sphi 0, %s113
      %s117 = sphi 0, %s116
      %s133 = sphi 0, %s117
      %s139 = sphi 0, %s141
      %s142 = sphi 0, %s139
      %s143 = sphi 0, %s142
      %s159 = sphi 0, %s143
      %s165 = sphi 0, %s167
      %s168 = sphi 0, %s165
      %s169 = sphi 0, %s168
      %s185 = sphi 0, %s169
      %s189 = sphi 0, %s189
      %s191 = sphi 0, %s189
      %s192 = sphi 0, %s191
      %s206 = sphi 0, %s192
      %s212 = sphi 0, %s214
      %s215 = sphi 0, %s212
      %s216 = sphi 0, %s215
      %s232 = sphi 0, %s216
    $region4: #{netg2_forward.1} parent=1 // loop_header_branch
      %16 = sbr.rel (%p14) target = $region8
    $region5: #{netg2_forward.1} parent=1 // loop_body
      %s18 = ssub.s32 %s13, 1
      %s19 = ssub.s32 %s13, 2
      %s26 = sadd.s32 1, %s21
      %p27 = scmp.ge.s32.totalorder %s26, 2
      %s28 = scalar_select %p27, 0, %s26
      %s29 = sadd.s32 1, %s20
      %s30 = scalar_select %p27, %s29, %s20
      %p31 = scmp.ge.s32.totalorder %s30, 2
      %s32 = scalar_select %p31, 0, %s30
      %s33 = ssub.s32 %s20, %s32
      %p34 = scmp.eq.s32.totalorder %s33, 0
      %s36 = sadd.s32 %s35, 1
      %s37 = scalar_select %p34, %s35, %s36
      %p40 = pneg %p34
      %p41 = scmp.eq.s32.totalorder %s13, 3
      %p42 = por %p40, %p41
      %p43 = scmp.ne.s32.totalorder %s35, %s38
      %p44 = scmp.eq.s32.totalorder %s13, 0
      %p45 = por %p43, %p44
      %p46 = scmp.ne.s32.totalorder %s35, %s38
      %p47 = scmp.eq.s32.totalorder %s18, 3
      %p48 = por %p46, %p47
      %p49 = scmp.ne.s32.totalorder %s38, %s39
      %p50 = scmp.eq.s32.totalorder %s18, 0
      %p51 = por %p49, %p50
      %p52 = scmp.ne.s32.totalorder %s38, %s39
      %p53 = scmp.eq.s32.totalorder %s19, 3
      %p54 = por %p52, %p53
      %p56 = scmp.ne.s32.totalorder %s39, %s55
      %p57 = scmp.eq.s32.totalorder %s19, 0
      %p58 = por %p56, %p57
      %s59 = ssub.s32 %s20, %s32
      %p60 = scmp.eq.s32.totalorder %s59, 0
      %s62 = sadd.s32 %s61, 1
      %s63 = scalar_select %p60, %s61, %s62
      %p66 = pneg %p60
      %p67 = scmp.eq.s32.totalorder %s13, 3
      %p68 = por %p66, %p67
      %p69 = scmp.ne.s32.totalorder %s61, %s64
      %p70 = scmp.eq.s32.totalorder %s13, 0
      %p71 = por %p69, %p70
      %p72 = scmp.ne.s32.totalorder %s61, %s64
      %p73 = scmp.eq.s32.totalorder %s18, 3
      %p74 = por %p72, %p73
      %p75 = scmp.ne.s32.totalorder %s64, %s65
      %p76 = scmp.eq.s32.totalorder %s18, 0
      %p77 = por %p75, %p76
      %p78 = scmp.ne.s32.totalorder %s64, %s65
      %p79 = scmp.eq.s32.totalorder %s19, 3
      %p80 = por %p78, %p79
      %p82 = scmp.ne.s32.totalorder %s65, %s81
      %p83 = scmp.eq.s32.totalorder %s19, 0
      %p84 = por %p82, %p83
      %s85 = ssub.s32 %s21, %s28
      %p86 = scmp.eq.s32.totalorder %s85, 0
      %s88 = sadd.s32 %s87, 1
      %s89 = scalar_select %p86, %s87, %s88
      %p92 = pneg %p86
      %p93 = scmp.eq.s32.totalorder %s13, 3
      %p94 = por %p92, %p93
      %p95 = scmp.ne.s32.totalorder %s87, %s90
      %p96 = scmp.eq.s32.totalorder %s13, 0
      %p97 = por %p95, %p96
      %p98 = scmp.ne.s32.totalorder %s87, %s90
      %p99 = scmp.eq.s32.totalorder %s18, 3
      %p100 = por %p98, %p99
      %p101 = scmp.ne.s32.totalorder %s90, %s91
      %p102 = scmp.eq.s32.totalorder %s18, 0
      %p103 = por %p101, %p102
      %p104 = scmp.ne.s32.totalorder %s90, %s91
      %p105 = scmp.eq.s32.totalorder %s19, 3
      %p106 = por %p104, %p105
      %p108 = scmp.ne.s32.totalorder %s91, %s107
      %p109 = scmp.eq.s32.totalorder %s19, 0
      %p110 = por %p108, %p109
      %s111 = ssub.s32 %s21, %s28
      %p112 = scmp.eq.s32.totalorder %s111, 0
      %s114 = sadd.s32 %s113, 1
      %s115 = scalar_select %p112, %s113, %s114
      %p118 = pneg %p112
      %p119 = scmp.eq.s32.totalorder %s13, 3
      %p120 = por %p118, %p119
      %p121 = scmp.ne.s32.totalorder %s113, %s116
      %p122 = scmp.eq.s32.totalorder %s13, 0
      %p123 = por %p121, %p122
      %p124 = scmp.ne.s32.totalorder %s113, %s116
      %p125 = scmp.eq.s32.totalorder %s18, 3
      %p126 = por %p124, %p125
      %p127 = scmp.ne.s32.totalorder %s116, %s117
      %p128 = scmp.eq.s32.totalorder %s18, 0
      %p129 = por %p127, %p128
      %p130 = scmp.ne.s32.totalorder %s116, %s117
      %p131 = scmp.eq.s32.totalorder %s19, 3
      %p132 = por %p130, %p131
      %p134 = scmp.ne.s32.totalorder %s117, %s133
      %p135 = scmp.eq.s32.totalorder %s19, 0
      %p136 = por %p134, %p135
      %s137 = ssub.s32 %s21, %s28
      %p138 = scmp.eq.s32.totalorder %s137, 0
      %s140 = sadd.s32 %s139, 1
      %s141 = scalar_select %p138, %s139, %s140
      %p144 = pneg %p138
      %p145 = scmp.eq.s32.totalorder %s13, 3
      %p146 = por %p144, %p145
      %p147 = scmp.ne.s32.totalorder %s139, %s142
      %p148 = scmp.eq.s32.totalorder %s13, 0
      %p149 = por %p147, %p148
      %p150 = scmp.ne.s32.totalorder %s139, %s142
      %p151 = scmp.eq.s32.totalorder %s18, 3
      %p152 = por %p150, %p151
      %p153 = scmp.ne.s32.totalorder %s142, %s143
      %p154 = scmp.eq.s32.totalorder %s18, 0
      %p155 = por %p153, %p154
      %p156 = scmp.ne.s32.totalorder %s142, %s143
      %p157 = scmp.eq.s32.totalorder %s19, 3
      %p158 = por %p156, %p157
      %p160 = scmp.ne.s32.totalorder %s143, %s159
      %p161 = scmp.eq.s32.totalorder %s19, 0
      %p162 = por %p160, %p161
      %s163 = ssub.s32 %s21, %s28
      %p164 = scmp.eq.s32.totalorder %s163, 0
      %s166 = sadd.s32 %s165, 1
      %s167 = scalar_select %p164, %s165, %s166
      %p170 = pneg %p164
      %p171 = scmp.eq.s32.totalorder %s13, 3
      %p172 = por %p170, %p171
      %p173 = scmp.ne.s32.totalorder %s165, %s168
      %p174 = scmp.eq.s32.totalorder %s13, 0
      %p175 = por %p173, %p174
      %p176 = scmp.ne.s32.totalorder %s165, %s168
      %p177 = scmp.eq.s32.totalorder %s18, 3
      %p178 = por %p176, %p177
      %p179 = scmp.ne.s32.totalorder %s168, %s169
      %p180 = scmp.eq.s32.totalorder %s18, 0
      %p181 = por %p179, %p180
      %p182 = scmp.ne.s32.totalorder %s168, %s169
      %p183 = scmp.eq.s32.totalorder %s19, 3
      %p184 = por %p182, %p183
      %p186 = scmp.ne.s32.totalorder %s169, %s185
      %p187 = scmp.eq.s32.totalorder %s19, 0
      %p188 = por %p186, %p187
      %s190 = sadd.s32 %s189, 1
      %p193 = scmp.eq.s32.totalorder %s13, 3
      %p194 = scmp.ne.s32.totalorder %s189, %s191
      %p195 = scmp.eq.s32.totalorder %s13, 0
      %p196 = por %p194, %p195
      %p197 = scmp.ne.s32.totalorder %s189, %s191
      %p198 = scmp.eq.s32.totalorder %s18, 3
      %p199 = por %p197, %p198
      %p200 = scmp.ne.s32.totalorder %s191, %s192
      %p201 = scmp.eq.s32.totalorder %s18, 0
      %p202 = por %p200, %p201
      %p203 = scmp.ne.s32.totalorder %s191, %s192
      %p204 = scmp.eq.s32.totalorder %s19, 3
      %p205 = por %p203, %p204
      %p207 = scmp.ne.s32.totalorder %s192, %s206
      %p208 = scmp.eq.s32.totalorder %s19, 0
      %p209 = por %p207, %p208
      %s210 = ssub.s32 %s20, %s32
      %p211 = scmp.eq.s32.totalorder %s210, 0
      %s213 = sadd.s32 %s212, 1
      %s214 = scalar_select %p211, %s212, %s213
      %p217 = pneg %p211
      %p218 = scmp.eq.s32.totalorder %s13, 3
      %p219 = por %p217, %p218
      %p220 = scmp.ne.s32.totalorder %s212, %s215
      %p221 = scmp.eq.s32.totalorder %s13, 0
      %p222 = por %p220, %p221
      %p223 = scmp.ne.s32.totalorder %s212, %s215
      %p224 = scmp.eq.s32.totalorder %s18, 3
      %p225 = por %p223, %p224
      %p226 = scmp.ne.s32.totalorder %s215, %s216
      %p227 = scmp.eq.s32.totalorder %s18, 0
      %p228 = por %p226, %p227
      %p229 = scmp.ne.s32.totalorder %s215, %s216
      %p230 = scmp.eq.s32.totalorder %s19, 3
      %p231 = por %p229, %p230
      %p233 = scmp.ne.s32.totalorder %s216, %s232
      %p234 = scmp.eq.s32.totalorder %s19, 0
      %p235 = por %p233, %p234
      %p236 = scmp.le.s32.totalorder 1, %s13
      %p237 = scmp.lt.s32.totalorder %s13, 5
      %p238 = pnand %p236, %p237
      %p239 = pneg %p238
      // Predicated region
      $region9: #{netg2_forward.1} parent=5 // pred_check
        _
      $region10: #{netg2_forward.1} parent=5 // pred_check_branch
        %241 = sbr.rel (%p238) target = $region12
      $region11: #{netg2_forward.1} parent=5 // pred_region
        %s242 = ssub.s32 %s13, 1
        // Predicated region
        $region13: #{netg2_forward.1} parent=11 // pred_check
          %p243 = pneg %p202
        $region14: #{netg2_forward.1} parent=11 // pred_check_branch
          %245 = sbr.rel (%p243) target = $region16
        $region15: #{netg2_forward.1} parent=11 // pred_region
          _
        $region16: #{netg2_forward.1} parent=11 // pred_fallthru
          _
      $region12: #{netg2_forward.1} parent=5 // pred_fallthru
        _
      %p246 = scmp.lt.s32.totalorder %s13, 4
      // Predicated region
      $region17: #{netg2_forward.1} parent=5 // pred_check
        %p247 = pneg %p246
      $region18: #{netg2_forward.1} parent=5 // pred_check_branch
        %249 = sbr.rel (%p247) target = $region20
      $region19: #{netg2_forward.1} parent=5 // pred_region
        // Predicated region
        $region21: #{netg2_forward.1} parent=19 // pred_check
          %p250 = pneg %p45
        $region22: #{netg2_forward.1} parent=19 // pred_check_branch
          %252 = sbr.rel (%p250) target = $region24
        $region23: #{netg2_forward.1} parent=19 // pred_region
          %s253 = smul.u32 8, %s20
          %p254 = scmp.lt.s32.totalorder %s253, 15
          %s255 = scalar_select %p254, %s253, 15
          %s256 = smul.addr %s255, 4
          %s257 = scalar_lea.vmem %s0, %s256
          %s258 = smul.u32 8, %s20
        $region24: #{netg2_forward.1} parent=19 // pred_fallthru
          _
        // Predicated region
        $region25: #{netg2_forward.1} parent=19 // pred_check
          %p259 = pneg %p71
        $region26: #{netg2_forward.1} parent=19 // pred_check_branch
          %261 = sbr.rel (%p259) target = $region28
        $region27: #{netg2_forward.1} parent=19 // pred_region
          %s262 = smul.u32 8, %s20
          %p263 = scmp.lt.s32.totalorder %s262, 15
          %s264 = scalar_select %p263, %s262, 15
          %s265 = smul.addr %s264, 3
          %s266 = smul.addr %s265, 4
          %s267 = scalar_lea.vmem %s1, %s266
          %s268 = smul.u32 8, %s20
        $region28: #{netg2_forward.1} parent=19 // pred_fallthru
          _
        // Predicated region
        $region29: #{netg2_forward.1} parent=19 // pred_check
          %p269 = pneg %p97
        $region30: #{netg2_forward.1} parent=19 // pred_check_branch
          %271 = sbr.rel (%p269) target = $region32
        $region31: #{netg2_forward.1} parent=19 // pred_region
          %s272 = sand.u32 %s87, 1
          %s273 = sand.u32 %s87, 1
          %s274 = smul.addr %s273, 104
          %s275 = scalar_lea.vmem [#allocation3], %s274
          %s276 = smul.u32 2, %s21
          %s277 = smul.addr %s276, 4
          %s278 = scalar_lea.vmem %s2, %s277
          // Predicated region
          $region33: #{netg2_forward.1} parent=31 // pred_check
            _
          $region34: #{netg2_forward.1} parent=31 // pred_check_branch
            %280 = sbr.rel (0) target = $region36
          $region35: #{netg2_forward.1} parent=31 // pred_region
            // Predicated region
            $region37: #{netg2_forward.1} parent=35 // pred_check
              _
            $region38: #{netg2_forward.1} parent=35 // pred_check_branch
              %282 = sbr.rel (0) target = $region40
            $region39: #{netg2_forward.1} parent=35 // pred_region
              // Predicated region
              $region52: #{netg2_forward.1} parent=39 // pred_check
                _
              $region53: #{netg2_forward.1} parent=39 // pred_check_branch
                %322 = sbr.rel (0) target = $region55
              $region54: #{netg2_forward.1} parent=39 // pred_region
                loop: start=0, step=1, limit=1
                $region56: #{netg2_forward.1} parent=54 // loop_pre_header
                  _
                $region57: #{netg2_forward.1} parent=54 // loop_header
                  %s324 = sphi 0, %s328
                  %p325 = scmp.ge.s32.totalorder %s324, 1
                  %s329 = sphi %s278, %s278
                  %s330 = sphi %s275, %s275
                $region58: #{netg2_forward.1} parent=54 // loop_header_branch
                  %327 = sbr.rel (%p325) target = $region62
                $region59: #{netg2_forward.1} parent=54 // loop_body
                  %v331 = vld [vmem:[%s329] sm:$0xff]
                  %332 = vst [vmem:[%s330] sm:$0xff] %v331
                  %v333 = vld [vmem:[%s329 + $0x10] sm:$0xff]
                  %334 = vst [vmem:[%s330 + $0x8] sm:$0xff] %v333
                  %v335 = vld [vmem:[%s329 + $0x20] sm:$0xff]
                  %336 = vst [vmem:[%s330 + $0x10] sm:$0xff] %v335
                  %v337 = vld [vmem:[%s329 + $0x30] sm:$0xff]
                  %338 = vst [vmem:[%s330 + $0x18] sm:$0xff] %v337
                  %v339 = vld [vmem:[%s329 + $0x40] sm:$0xff]
                  %340 = vst [vmem:[%s330 + $0x20] sm:$0xff] %v339
                  %v341 = vld [vmem:[%s329 + $0x50] sm:$0xff]
                  %342 = vst [vmem:[%s330 + $0x28] sm:$0xff] %v341
                  %v343 = vld [vmem:[%s329 + $0x60] sm:$0xff]
                  %344 = vst [vmem:[%s330 + $0x30] sm:$0xff] %v343
                  %v345 = vld [vmem:[%s329 + $0x70] sm:$0xff]
                  %346 = vst [vmem:[%s330 + $0x38] sm:$0xff] %v345
                  %v347 = vld [vmem:[%s329 + $0x80] sm:$0xff]
                  %348 = vst [vmem:[%s330 + $0x40] sm:$0xff] %v347
                  %v349 = vld [vmem:[%s329 + $0x90] sm:$0xff]
                  %350 = vst [vmem:[%s330 + $0x48] sm:$0xff] %v349
                  %v351 = vld [vmem:[%s329 + $0xa0] sm:$0xff]
                  %352 = vst [vmem:[%s330 + $0x50] sm:$0xff] %v351
                  %v353 = vld [vmem:[%s329 + $0xb0] sm:$0xff]
                  %354 = vst [vmem:[%s330 + $0x58] sm:$0xff] %v353
                  %v355 = vld [vmem:[%s329 + $0xc0] sm:$0xff]
                  %356 = vst [vmem:[%s330 + $0x60] sm:$0xff] %v355
                $region60: #{netg2_forward.1} parent=54 // loop_footer
                  %s328 = sadd.s32 1, %s324
                $region61: #{netg2_forward.1} parent=54 // loop_footer_branch
                  %323 = sbr.rel target = $region57
                $region62: #{netg2_forward.1} parent=54 // loop_exit
                  _
              $region55: #{netg2_forward.1} parent=39 // pred_fallthru
                _
              // Predicated region
              $region63: #{netg2_forward.1} parent=39 // pred_check
                _
              $region64: #{netg2_forward.1} parent=39 // pred_check_branch
                %358 = sbr.rel target = $region66
              $region65: #{netg2_forward.1} parent=39 // pred_region
                _
              $region66: #{netg2_forward.1} parent=39 // pred_fallthru
                _
            $region40: #{netg2_forward.1} parent=35 // pred_fallthru
              _
            // Predicated region
            $region41: #{netg2_forward.1} parent=35 // pred_check
              _
            $region42: #{netg2_forward.1} parent=35 // pred_check_branch
              %284 = sbr.rel target = $region44
            $region43: #{netg2_forward.1} parent=35 // pred_region
              %s286 = ssub.s32 256, 1
              loop: start=0, step=1, limit=1
              $region45: #{netg2_forward.1} parent=43 // loop_pre_header
                _
              $region46: #{netg2_forward.1} parent=43 // loop_header
                %s288 = sphi 0, %s292
                %p289 = scmp.ge.s32.totalorder %s288, 1
                %s293 = sphi %s278, %s278
                %s294 = sphi %s275, %s275
              $region47: #{netg2_forward.1} parent=43 // loop_header_branch
                %291 = sbr.rel (%p289) target = $region51
              $region48: #{netg2_forward.1} parent=43 // loop_body
                %v295 = vld [vmem:[%s293] sm:%s286]
                %296 = vst [vmem:[%s294] sm:%s286] %v295
                %v297 = vld [vmem:[%s293 + $0x10] sm:%s286]
                %298 = vst [vmem:[%s294 + $0x8] sm:%s286] %v297
                %v299 = vld [vmem:[%s293 + $0x20] sm:%s286]
                %300 = vst [vmem:[%s294 + $0x10] sm:%s286] %v299
                %v301 = vld [vmem:[%s293 + $0x30] sm:%s286]
                %302 = vst [vmem:[%s294 + $0x18] sm:%s286] %v301
                %v303 = vld [vmem:[%s293 + $0x40] sm:%s286]
                %304 = vst [vmem:[%s294 + $0x20] sm:%s286] %v303
                %v305 = vld [vmem:[%s293 + $0x50] sm:%s286]
                %306 = vst [vmem:[%s294 + $0x28] sm:%s286] %v305
                %v307 = vld [vmem:[%s293 + $0x60] sm:%s286]
                %308 = vst [vmem:[%s294 + $0x30] sm:%s286] %v307
                %v309 = vld [vmem:[%s293 + $0x70] sm:%s286]
                %310 = vst [vmem:[%s294 + $0x38] sm:%s286] %v309
                %v311 = vld [vmem:[%s293 + $0x80] sm:%s286]
                %312 = vst [vmem:[%s294 + $0x40] sm:%s286] %v311
                %v313 = vld [vmem:[%s293 + $0x90] sm:%s286]
                %314 = vst [vmem:[%s294 + $0x48] sm:%s286] %v313
                %v315 = vld [vmem:[%s293 + $0xa0] sm:%s286]
                %316 = vst [vmem:[%s294 + $0x50] sm:%s286] %v315
                %v317 = vld [vmem:[%s293 + $0xb0] sm:%s286]
                %318 = vst [vmem:[%s294 + $0x58] sm:%s286] %v317
                %v319 = vld [vmem:[%s293 + $0xc0] sm:%s286]
                %320 = vst [vmem:[%s294 + $0x60] sm:%s286] %v319
              $region49: #{netg2_forward.1} parent=43 // loop_footer
                %s292 = sadd.s32 1, %s288
              $region50: #{netg2_forward.1} parent=43 // loop_footer_branch
                %287 = sbr.rel target = $region46
              $region51: #{netg2_forward.1} parent=43 // loop_exit
                _
            $region44: #{netg2_forward.1} parent=35 // pred_fallthru
              _
          $region36: #{netg2_forward.1} parent=31 // pred_fallthru
            _
          %359 = vnop
        $region32: #{netg2_forward.1} parent=19 // pred_fallthru
          _
        // Predicated region
        $region67: #{netg2_forward.1} parent=19 // pred_check
          %p360 = pneg %p123
        $region68: #{netg2_forward.1} parent=19 // pred_check_branch
          %362 = sbr.rel (%p360) target = $region70
        $region69: #{netg2_forward.1} parent=19 // pred_region
          %s363 = sand.u32 %s113, 1
          %s364 = sand.u32 %s113, 1
          %s365 = smul.addr %s364, 384
          %s366 = scalar_lea.vmem [#allocation4], %s365
          %s367 = smul.u32 2, %s21
          %s368 = smul.addr %s367, 4
          %s369 = scalar_lea.vmem %s3, %s368
          // Predicated region
          $region71: #{netg2_forward.1} parent=69 // pred_check
            _
          $region72: #{netg2_forward.1} parent=69 // pred_check_branch
            %371 = sbr.rel (0) target = $region74
          $region73: #{netg2_forward.1} parent=69 // pred_region
            // Predicated region
            $region75: #{netg2_forward.1} parent=73 // pred_check
              _
            $region76: #{netg2_forward.1} parent=73 // pred_check_branch
              %373 = sbr.rel (0) target = $region78
            $region77: #{netg2_forward.1} parent=73 // pred_region
              // Predicated region
              $region90: #{netg2_forward.1} parent=77 // pred_check
                _
              $region91: #{netg2_forward.1} parent=77 // pred_check_branch
                %483 = sbr.rel (0) target = $region93
              $region92: #{netg2_forward.1} parent=77 // pred_region
                loop: start=0, step=1, limit=1
                $region94: #{netg2_forward.1} parent=92 // loop_pre_header
                  _
                $region95: #{netg2_forward.1} parent=92 // loop_header
                  %s485 = sphi 0, %s489
                  %p486 = scmp.ge.s32.totalorder %s485, 1
                  %s490 = sphi %s369, %s369
                  %s491 = sphi %s366, %s366
                $region96: #{netg2_forward.1} parent=92 // loop_header_branch
                  %488 = sbr.rel (%p486) target = $region100
                $region97: #{netg2_forward.1} parent=92 // loop_body
                  %v492 = vld [vmem:[%s490] sm:$0xff]
                  %493 = vst [vmem:[%s491] sm:$0xff] %v492
                  %v494 = vld [vmem:[%s490 + $0x10] sm:$0xff]
                  %495 = vst [vmem:[%s491 + $0x8] sm:$0xff] %v494
                  %v496 = vld [vmem:[%s490 + $0x20] sm:$0xff]
                  %497 = vst [vmem:[%s491 + $0x10] sm:$0xff] %v496
                  %v498 = vld [vmem:[%s490 + $0x30] sm:$0xff]
                  %499 = vst [vmem:[%s491 + $0x18] sm:$0xff] %v498
                  %v500 = vld [vmem:[%s490 + $0x40] sm:$0xff]
                  %501 = vst [vmem:[%s491 + $0x20] sm:$0xff] %v500
                  %v502 = vld [vmem:[%s490 + $0x50] sm:$0xff]
                  %503 = vst [vmem:[%s491 + $0x28] sm:$0xff] %v502
                  %v504 = vld [vmem:[%s490 + $0x60] sm:$0xff]
                  %505 = vst [vmem:[%s491 + $0x30] sm:$0xff] %v504
                  %v506 = vld [vmem:[%s490 + $0x70] sm:$0xff]
                  %507 = vst [vmem:[%s491 + $0x38] sm:$0xff] %v506
                  %v508 = vld [vmem:[%s490 + $0x80] sm:$0xff]
                  %509 = vst [vmem:[%s491 + $0x40] sm:$0xff] %v508
                  %v510 = vld [vmem:[%s490 + $0x90] sm:$0xff]
                  %511 = vst [vmem:[%s491 + $0x48] sm:$0xff] %v510
                  %v512 = vld [vmem:[%s490 + $0xa0] sm:$0xff]
                  %513 = vst [vmem:[%s491 + $0x50] sm:$0xff] %v512
                  %v514 = vld [vmem:[%s490 + $0xb0] sm:$0xff]
                  %515 = vst [vmem:[%s491 + $0x58] sm:$0xff] %v514
                  %v516 = vld [vmem:[%s490 + $0xc0] sm:$0xff]
                  %517 = vst [vmem:[%s491 + $0x60] sm:$0xff] %v516
                  %v518 = vld [vmem:[%s490 + $0xd0] sm:$0xff]
                  %519 = vst [vmem:[%s491 + $0x68] sm:$0xff] %v518
                  %v520 = vld [vmem:[%s490 + $0xe0] sm:$0xff]
                  %521 = vst [vmem:[%s491 + $0x70] sm:$0xff] %v520
                  %v522 = vld [vmem:[%s490 + $0xf0] sm:$0xff]
                  %523 = vst [vmem:[%s491 + $0x78] sm:$0xff] %v522
                  %v524 = vld [vmem:[%s490 + $0x100] sm:$0xff]
                  %525 = vst [vmem:[%s491 + $0x80] sm:$0xff] %v524
                  %v526 = vld [vmem:[%s490 + $0x110] sm:$0xff]
                  %527 = vst [vmem:[%s491 + $0x88] sm:$0xff] %v526
                  %v528 = vld [vmem:[%s490 + $0x120] sm:$0xff]
                  %529 = vst [vmem:[%s491 + $0x90] sm:$0xff] %v528
                  %v530 = vld [vmem:[%s490 + $0x130] sm:$0xff]
                  %531 = vst [vmem:[%s491 + $0x98] sm:$0xff] %v530
                  %v532 = vld [vmem:[%s490 + $0x140] sm:$0xff]
                  %533 = vst [vmem:[%s491 + $0xa0] sm:$0xff] %v532
                  %v534 = vld [vmem:[%s490 + $0x150] sm:$0xff]
                  %535 = vst [vmem:[%s491 + $0xa8] sm:$0xff] %v534
                  %v536 = vld [vmem:[%s490 + $0x160] sm:$0xff]
                  %537 = vst [vmem:[%s491 + $0xb0] sm:$0xff] %v536
                  %v538 = vld [vmem:[%s490 + $0x170] sm:$0xff]
                  %539 = vst [vmem:[%s491 + $0xb8] sm:$0xff] %v538
                  %v540 = vld [vmem:[%s490 + $0x180] sm:$0xff]
                  %541 = vst [vmem:[%s491 + $0xc0] sm:$0xff] %v540
                  %v542 = vld [vmem:[%s490 + $0x190] sm:$0xff]
                  %543 = vst [vmem:[%s491 + $0xc8] sm:$0xff] %v542
                  %v544 = vld [vmem:[%s490 + $0x1a0] sm:$0xff]
                  %545 = vst [vmem:[%s491 + $0xd0] sm:$0xff] %v544
                  %v546 = vld [vmem:[%s490 + $0x1b0] sm:$0xff]
                  %547 = vst [vmem:[%s491 + $0xd8] sm:$0xff] %v546
                  %v548 = vld [vmem:[%s490 + $0x1c0] sm:$0xff]
                  %549 = vst [vmem:[%s491 + $0xe0] sm:$0xff] %v548
                  %v550 = vld [vmem:[%s490 + $0x1d0] sm:$0xff]
                  %551 = vst [vmem:[%s491 + $0xe8] sm:$0xff] %v550
                  %v552 = vld [vmem:[%s490 + $0x1e0] sm:$0xff]
                  %553 = vst [vmem:[%s491 + $0xf0] sm:$0xff] %v552
                  %v554 = vld [vmem:[%s490 + $0x1f0] sm:$0xff]
                  %555 = vst [vmem:[%s491 + $0xf8] sm:$0xff] %v554
                  %v556 = vld [vmem:[%s490 + $0x200] sm:$0xff]
                  %557 = vst [vmem:[%s491 + $0x100] sm:$0xff] %v556
                  %v558 = vld [vmem:[%s490 + $0x210] sm:$0xff]
                  %559 = vst [vmem:[%s491 + $0x108] sm:$0xff] %v558
                  %v560 = vld [vmem:[%s490 + $0x220] sm:$0xff]
                  %561 = vst [vmem:[%s491 + $0x110] sm:$0xff] %v560
                  %v562 = vld [vmem:[%s490 + $0x230] sm:$0xff]
                  %563 = vst [vmem:[%s491 + $0x118] sm:$0xff] %v562
                  %v564 = vld [vmem:[%s490 + $0x240] sm:$0xff]
                  %565 = vst [vmem:[%s491 + $0x120] sm:$0xff] %v564
                  %v566 = vld [vmem:[%s490 + $0x250] sm:$0xff]
                  %567 = vst [vmem:[%s491 + $0x128] sm:$0xff] %v566
                  %v568 = vld [vmem:[%s490 + $0x260] sm:$0xff]
                  %569 = vst [vmem:[%s491 + $0x130] sm:$0xff] %v568
                  %v570 = vld [vmem:[%s490 + $0x270] sm:$0xff]
                  %571 = vst [vmem:[%s491 + $0x138] sm:$0xff] %v570
                  %v572 = vld [vmem:[%s490 + $0x280] sm:$0xff]
                  %573 = vst [vmem:[%s491 + $0x140] sm:$0xff] %v572
                  %v574 = vld [vmem:[%s490 + $0x290] sm:$0xff]
                  %575 = vst [vmem:[%s491 + $0x148] sm:$0xff] %v574
                  %v576 = vld [vmem:[%s490 + $0x2a0] sm:$0xff]
                  %577 = vst [vmem:[%s491 + $0x150] sm:$0xff] %v576
                  %v578 = vld [vmem:[%s490 + $0x2b0] sm:$0xff]
                  %579 = vst [vmem:[%s491 + $0x158] sm:$0xff] %v578
                  %v580 = vld [vmem:[%s490 + $0x2c0] sm:$0xff]
                  %581 = vst [vmem:[%s491 + $0x160] sm:$0xff] %v580
                  %v582 = vld [vmem:[%s490 + $0x2d0] sm:$0xff]
                  %583 = vst [vmem:[%s491 + $0x168] sm:$0xff] %v582
                  %v584 = vld [vmem:[%s490 + $0x2e0] sm:$0xff]
                  %585 = vst [vmem:[%s491 + $0x170] sm:$0xff] %v584
                  %v586 = vld [vmem:[%s490 + $0x2f0] sm:$0xff]
                  %587 = vst [vmem:[%s491 + $0x178] sm:$0xff] %v586
                $region98: #{netg2_forward.1} parent=92 // loop_footer
                  %s489 = sadd.s32 1, %s485
                $region99: #{netg2_forward.1} parent=92 // loop_footer_branch
                  %484 = sbr.rel target = $region95
                $region100: #{netg2_forward.1} parent=92 // loop_exit
                  _
              $region93: #{netg2_forward.1} parent=77 // pred_fallthru
                _
              // Predicated region
              $region101: #{netg2_forward.1} parent=77 // pred_check
                _
              $region102: #{netg2_forward.1} parent=77 // pred_check_branch
                %589 = sbr.rel target = $region104
              $region103: #{netg2_forward.1} parent=77 // pred_region
                _
              $region104: #{netg2_forward.1} parent=77 // pred_fallthru
                _
            $region78: #{netg2_forward.1} parent=73 // pred_fallthru
              _
            // Predicated region
            $region79: #{netg2_forward.1} parent=73 // pred_check
              _
            $region80: #{netg2_forward.1} parent=73 // pred_check_branch
              %375 = sbr.rel target = $region82
            $region81: #{netg2_forward.1} parent=73 // pred_region
              %s377 = ssub.s32 256, 1
              loop: start=0, step=1, limit=1
              $region83: #{netg2_forward.1} parent=81 // loop_pre_header
                _
              $region84: #{netg2_forward.1} parent=81 // loop_header
                %s379 = sphi 0, %s383
                %p380 = scmp.ge.s32.totalorder %s379, 1
                %s384 = sphi %s369, %s369
                %s385 = sphi %s366, %s366
              $region85: #{netg2_forward.1} parent=81 // loop_header_branch
                %382 = sbr.rel (%p380) target = $region89
              $region86: #{netg2_forward.1} parent=81 // loop_body
                %v386 = vld [vmem:[%s384] sm:%s377]
                %387 = vst [vmem:[%s385] sm:%s377] %v386
                %v388 = vld [vmem:[%s384 + $0x10] sm:%s377]
                %389 = vst [vmem:[%s385 + $0x8] sm:%s377] %v388
                %v390 = vld [vmem:[%s384 + $0x20] sm:%s377]
                %391 = vst [vmem:[%s385 + $0x10] sm:%s377] %v390
                %v392 = vld [vmem:[%s384 + $0x30] sm:%s377]
                %393 = vst [vmem:[%s385 + $0x18] sm:%s377] %v392
                %v394 = vld [vmem:[%s384 + $0x40] sm:%s377]
                %395 = vst [vmem:[%s385 + $0x20] sm:%s377] %v394
                %v396 = vld [vmem:[%s384 + $0x50] sm:%s377]
                %397 = vst [vmem:[%s385 + $0x28] sm:%s377] %v396
                %v398 = vld [vmem:[%s384 + $0x60] sm:%s377]
                %399 = vst [vmem:[%s385 + $0x30] sm:%s377] %v398
                %v400 = vld [vmem:[%s384 + $0x70] sm:%s377]
                %401 = vst [vmem:[%s385 + $0x38] sm:%s377] %v400
                %v402 = vld [vmem:[%s384 + $0x80] sm:%s377]
                %403 = vst [vmem:[%s385 + $0x40] sm:%s377] %v402
                %v404 = vld [vmem:[%s384 + $0x90] sm:%s377]
                %405 = vst [vmem:[%s385 + $0x48] sm:%s377] %v404
                %v406 = vld [vmem:[%s384 + $0xa0] sm:%s377]
                %407 = vst [vmem:[%s385 + $0x50] sm:%s377] %v406
                %v408 = vld [vmem:[%s384 + $0xb0] sm:%s377]
                %409 = vst [vmem:[%s385 + $0x58] sm:%s377] %v408
                %v410 = vld [vmem:[%s384 + $0xc0] sm:%s377]
                %411 = vst [vmem:[%s385 + $0x60] sm:%s377] %v410
                %v412 = vld [vmem:[%s384 + $0xd0] sm:%s377]
                %413 = vst [vmem:[%s385 + $0x68] sm:%s377] %v412
                %v414 = vld [vmem:[%s384 + $0xe0] sm:%s377]
                %415 = vst [vmem:[%s385 + $0x70] sm:%s377] %v414
                %v416 = vld [vmem:[%s384 + $0xf0] sm:%s377]
                %417 = vst [vmem:[%s385 + $0x78] sm:%s377] %v416
                %v418 = vld [vmem:[%s384 + $0x100] sm:%s377]
                %419 = vst [vmem:[%s385 + $0x80] sm:%s377] %v418
                %v420 = vld [vmem:[%s384 + $0x110] sm:%s377]
                %421 = vst [vmem:[%s385 + $0x88] sm:%s377] %v420
                %v422 = vld [vmem:[%s384 + $0x120] sm:%s377]
                %423 = vst [vmem:[%s385 + $0x90] sm:%s377] %v422
                %v424 = vld [vmem:[%s384 + $0x130] sm:%s377]
                %425 = vst [vmem:[%s385 + $0x98] sm:%s377] %v424
                %v426 = vld [vmem:[%s384 + $0x140] sm:%s377]
                %427 = vst [vmem:[%s385 + $0xa0] sm:%s377] %v426
                %v428 = vld [vmem:[%s384 + $0x150] sm:%s377]
                %429 = vst [vmem:[%s385 + $0xa8] sm:%s377] %v428
                %v430 = vld [vmem:[%s384 + $0x160] sm:%s377]
                %431 = vst [vmem:[%s385 + $0xb0] sm:%s377] %v430
                %v432 = vld [vmem:[%s384 + $0x170] sm:%s377]
                %433 = vst [vmem:[%s385 + $0xb8] sm:%s377] %v432
                %v434 = vld [vmem:[%s384 + $0x180] sm:%s377]
                %435 = vst [vmem:[%s385 + $0xc0] sm:%s377] %v434
                %v436 = vld [vmem:[%s384 + $0x190] sm:%s377]
                %437 = vst [vmem:[%s385 + $0xc8] sm:%s377] %v436
                %v438 = vld [vmem:[%s384 + $0x1a0] sm:%s377]
                %439 = vst [vmem:[%s385 + $0xd0] sm:%s377] %v438
                %v440 = vld [vmem:[%s384 + $0x1b0] sm:%s377]
                %441 = vst [vmem:[%s385 + $0xd8] sm:%s377] %v440
                %v442 = vld [vmem:[%s384 + $0x1c0] sm:%s377]
                %443 = vst [vmem:[%s385 + $0xe0] sm:%s377] %v442
                %v444 = vld [vmem:[%s384 + $0x1d0] sm:%s377]
                %445 = vst [vmem:[%s385 + $0xe8] sm:%s377] %v444
                %v446 = vld [vmem:[%s384 + $0x1e0] sm:%s377]
                %447 = vst [vmem:[%s385 + $0xf0] sm:%s377] %v446
                %v448 = vld [vmem:[%s384 + $0x1f0] sm:%s377]
                %449 = vst [vmem:[%s385 + $0xf8] sm:%s377] %v448
                %v450 = vld [vmem:[%s384 + $0x200] sm:%s377]
                %451 = vst [vmem:[%s385 + $0x100] sm:%s377] %v450
                %v452 = vld [vmem:[%s384 + $0x210] sm:%s377]
                %453 = vst [vmem:[%s385 + $0x108] sm:%s377] %v452
                %v454 = vld [vmem:[%s384 + $0x220] sm:%s377]
                %455 = vst [vmem:[%s385 + $0x110] sm:%s377] %v454
                %v456 = vld [vmem:[%s384 + $0x230] sm:%s377]
                %457 = vst [vmem:[%s385 + $0x118] sm:%s377] %v456
                %v458 = vld [vmem:[%s384 + $0x240] sm:%s377]
                %459 = vst [vmem:[%s385 + $0x120] sm:%s377] %v458
                %v460 = vld [vmem:[%s384 + $0x250] sm:%s377]
                %461 = vst [vmem:[%s385 + $0x128] sm:%s377] %v460
                %v462 = vld [vmem:[%s384 + $0x260] sm:%s377]
                %463 = vst [vmem:[%s385 + $0x130] sm:%s377] %v462
                %v464 = vld [vmem:[%s384 + $0x270] sm:%s377]
                %465 = vst [vmem:[%s385 + $0x138] sm:%s377] %v464
                %v466 = vld [vmem:[%s384 + $0x280] sm:%s377]
                %467 = vst [vmem:[%s385 + $0x140] sm:%s377] %v466
                %v468 = vld [vmem:[%s384 + $0x290] sm:%s377]
                %469 = vst [vmem:[%s385 + $0x148] sm:%s377] %v468
                %v470 = vld [vmem:[%s384 + $0x2a0] sm:%s377]
                %471 = vst [vmem:[%s385 + $0x150] sm:%s377] %v470
                %v472 = vld [vmem:[%s384 + $0x2b0] sm:%s377]
                %473 = vst [vmem:[%s385 + $0x158] sm:%s377] %v472
                %v474 = vld [vmem:[%s384 + $0x2c0] sm:%s377]
                %475 = vst [vmem:[%s385 + $0x160] sm:%s377] %v474
                %v476 = vld [vmem:[%s384 + $0x2d0] sm:%s377]
                %477 = vst [vmem:[%s385 + $0x168] sm:%s377] %v476
                %v478 = vld [vmem:[%s384 + $0x2e0] sm:%s377]
                %479 = vst [vmem:[%s385 + $0x170] sm:%s377] %v478
                %v480 = vld [vmem:[%s384 + $0x2f0] sm:%s377]
                %481 = vst [vmem:[%s385 + $0x178] sm:%s377] %v480
              $region87: #{netg2_forward.1} parent=81 // loop_footer
                %s383 = sadd.s32 1, %s379
              $region88: #{netg2_forward.1} parent=81 // loop_footer_branch
                %378 = sbr.rel target = $region84
              $region89: #{netg2_forward.1} parent=81 // loop_exit
                _
            $region82: #{netg2_forward.1} parent=73 // pred_fallthru
              _
          $region74: #{netg2_forward.1} parent=69 // pred_fallthru
            _
          %590 = vnop
        $region70: #{netg2_forward.1} parent=19 // pred_fallthru
          _
        // Predicated region
        $region105: #{netg2_forward.1} parent=19 // pred_check
          %p591 = pneg %p149
        $region106: #{netg2_forward.1} parent=19 // pred_check_branch
          %593 = sbr.rel (%p591) target = $region108
        $region107: #{netg2_forward.1} parent=19 // pred_region
          %s594 = smul.u32 2, %s21
          %p595 = scmp.lt.s32.totalorder %s594, 3
          %s596 = scalar_select %p595, %s594, 3
          %s597 = scalar_lea.vmem %s4, %s596
          %s598 = smul.u32 2, %s21
        $region108: #{netg2_forward.1} parent=19 // pred_fallthru
          _
        // Predicated region
        $region109: #{netg2_forward.1} parent=19 // pred_check
          %p599 = pneg %p175
        $region110: #{netg2_forward.1} parent=19 // pred_check_branch
          %601 = sbr.rel (%p599) target = $region112
        $region111: #{netg2_forward.1} parent=19 // pred_region
          %s602 = smul.u32 32, %s21
          %p603 = scmp.lt.s32.totalorder %s602, 63
          %s604 = scalar_select %p603, %s602, 63
          %s605 = smul.addr %s604, 2
          %s606 = smul.addr %s605, 4
          %s607 = scalar_lea.vmem %s5, %s606
          %s608 = smul.u32 32, %s21
        $region112: #{netg2_forward.1} parent=19 // pred_fallthru
          _
      $region20: #{netg2_forward.1} parent=5 // pred_fallthru
        _
      %p609 = scmp.le.s32.totalorder 1, %s13
      %p610 = scmp.lt.s32.totalorder %s13, 5
      %p611 = pnand %p609, %p610
      %p612 = pneg %p611
      // Predicated region
      $region113: #{netg2_forward.1} parent=5 // pred_check
        _
      $region114: #{netg2_forward.1} parent=5 // pred_check_branch
        %614 = sbr.rel (%p611) target = $region116
      $region115: #{netg2_forward.1} parent=5 // pred_region
        %s615 = ssub.s32 %s13, 1
        %s616 = sand.u32 %s90, 1
        %s617 = sand.u32 %s90, 1
        %s618 = smul.addr %s617, 104
        %s619 = scalar_lea.vmem [#allocation3], %s618
        // Predicated region
        $region117: #{netg2_forward.1} parent=115 // pred_check
          %p620 = pneg %p103
        $region118: #{netg2_forward.1} parent=115 // pred_check_branch
          %622 = sbr.rel (%p620) target = $region120
        $region119: #{netg2_forward.1} parent=115 // pred_region
          _
        $region120: #{netg2_forward.1} parent=115 // pred_fallthru
          _
        %s623 = sand.u32 %s116, 1
        %s624 = sand.u32 %s116, 1
        %s625 = smul.addr %s624, 384
        %s626 = scalar_lea.vmem [#allocation4], %s625
        // Predicated region
        $region121: #{netg2_forward.1} parent=115 // pred_check
          %p627 = pneg %p129
        $region122: #{netg2_forward.1} parent=115 // pred_check_branch
          %629 = sbr.rel (%p627) target = $region124
        $region123: #{netg2_forward.1} parent=115 // pred_region
          _
        $region124: #{netg2_forward.1} parent=115 // pred_fallthru
          _
        %s630 = smul.u32 8, %s22
        %p631 = scmp.lt.s32.totalorder %s630, 15
        %s632 = scalar_select %p631, %s630, 15
        %s633 = smul.addr %s632, 4
        %s634 = scalar_lea.vmem %s0, %s633
        %p635 = pneg %p51
        %p636 = pneg %p48
        %s637 = smul.u32 8, %s22
        %p638 = scmp.lt.s32.totalorder %s637, 15
        %s639 = scalar_select %p638, %s637, 15
        %s640 = smul.addr %s639, 3
        %s641 = smul.addr %s640, 4
        %s642 = scalar_lea.vmem %s1, %s641
        %p643 = pneg %p77
        %p644 = pneg %p74
        %s645 = sand.u32 %s90, 1
        %s646 = sand.u32 %s90, 1
        %s647 = smul.addr %s646, 104
        %s648 = scalar_lea.vmem [#allocation3], %s647
        %p649 = pneg %p103
        %p650 = pneg %p100
        %s651 = sand.u32 %s116, 1
        %s652 = sand.u32 %s116, 1
        %s653 = smul.addr %s652, 384
        %s654 = scalar_lea.vmem [#allocation4], %s653
        %p655 = pneg %p129
        %p656 = pneg %p126
        %s657 = smul.u32 2, %s23
        %p658 = scmp.lt.s32.totalorder %s657, 3
        %s659 = scalar_select %p658, %s657, 3
        %s660 = scalar_lea.vmem %s4, %s659
        %p661 = pneg %p155
        %p662 = pneg %p152
        %s663 = smul.u32 32, %s23
        %p664 = scmp.lt.s32.totalorder %s663, 63
        %s665 = scalar_select %p664, %s663, 63
        %s666 = smul.addr %s665, 2
        %s667 = smul.addr %s666, 4
        %s668 = scalar_lea.vmem %s5, %s667
        %p669 = pneg %p181
        %p670 = pneg %p178
        %p671 = pneg %p202
        %p672 = pneg %p199
        %p673 = pneg %p228
        %p674 = pneg %p225
        %s675 = smul.u32 8, %s22
        %p676 = scmp.lt.s32.totalorder %s675, 15
        %s677 = scalar_select %p676, %s675, 15
        %s678 = smul.addr %s677, 2
        %s679 = smul.addr %s678, 8
        %s680 = scalar_lea.vmem %s7, %s679
        %s681 = smul.u32 8, %s22
        %p682 = scmp.lt.s32.totalorder %s681, 15
        %s683 = scalar_select %p682, %s681, 15
        %s684 = smul.addr %s683, 4
        %s685 = scalar_lea.vmem %s0, %s684
        %s686 = smul.u32 8, %s22
        %s687 = smul.u32 8, %s22
        %p688 = scmp.lt.s32.totalorder %s687, 15
        %s689 = scalar_select %p688, %s687, 15
        %s690 = smul.addr %s689, 3
        %s691 = smul.addr %s690, 4
        %s692 = scalar_lea.vmem %s1, %s691
        %s693 = smul.u32 8, %s22
        %s694 = smul.u32 2, %s23
        %s695 = smul.u32 2, %s23
        %s696 = smul.u32 2, %s23
        %p697 = scmp.lt.s32.totalorder %s696, 3
        %s698 = scalar_select %p697, %s696, 3
        %s699 = scalar_lea.vmem %s4, %s698
        %s700 = smul.u32 2, %s23
        %s701 = smul.u32 32, %s23
        %p702 = scmp.lt.s32.totalorder %s701, 63
        %s703 = scalar_select %p702, %s701, 63
        %s704 = smul.addr %s703, 2
        %s705 = smul.addr %s704, 4
        %s706 = scalar_lea.vmem %s5, %s705
        %s707 = smul.u32 32, %s23
        %s708 = smul.u32 8, %s22
        %p709 = scmp.lt.s32.totalorder %s708, 15
        %s710 = scalar_select %p709, %s708, 15
        %s711 = smul.addr %s710, 2
        %s712 = smul.addr %s711, 8
        %s713 = scalar_lea.vmem %s7, %s712
        %s714 = smul.u32 8, %s22
        %p716 = scmp.eq.s32.totalorder %s23, 0
        // Predicated region
        $region125: #{netg2_forward.1} parent=115 // pred_check
          %p717 = pneg %p716
        $region126: #{netg2_forward.1} parent=115 // pred_check_branch
          %719 = sbr.rel (%p717) target = $region128
        $region127: #{netg2_forward.1} parent=115 // pred_region
          %720 = vst [vmem:[#allocation2] sm:$0xff] 0.0
          %721 = vst [vmem:[#allocation2 + $0x8] sm:$0xff] 0.0
          %722 = vst [vmem:[#allocation2 + $0x10] sm:$0xff] 0.0
          %723 = vst [vmem:[#allocation2 + $0x18] sm:$0xff] 0.0
          %724 = vst [vmem:[#allocation2 + $0x20] sm:$0xff] 0.0
          %725 = vst [vmem:[#allocation2 + $0x28] sm:$0xff] 0.0
          %726 = vst [vmem:[#allocation2 + $0x30] sm:$0xff] 0.0
          %727 = vst [vmem:[#allocation2 + $0x38] sm:$0xff] 0.0
          %728 = vst [vmem:[#allocation2 + $0x40] sm:$0xff] 0.0
          %729 = vst [vmem:[#allocation2 + $0x48] sm:$0xff] 0.0
          %730 = vst [vmem:[#allocation2 + $0x50] sm:$0xff] 0.0
          %731 = vst [vmem:[#allocation2 + $0x58] sm:$0xff] 0.0
          %732 = vst [vmem:[#allocation2 + $0x60] sm:$0xff] 0.0
          %733 = vst [vmem:[#allocation2 + $0x68] sm:$0xff] 0.0
          %734 = vst [vmem:[#allocation2 + $0x70] sm:$0xff] 0.0
          %735 = vst [vmem:[#allocation2 + $0x78] sm:$0xff] 0.0
        $region128: #{netg2_forward.1} parent=115 // pred_fallthru
          _
        %v736 = vld [vmem:[%s685] sm:$0xf]
        %v737 = vld [vmem:[%s685 + $0x4] sm:$0xf]
        %v738 = vld [vmem:[%s685 + $0x8] sm:$0xf]
        %v739 = vld [vmem:[%s685 + $0xc] sm:$0xf]
        %v740 = vld [vmem:[%s685 + $0x10] sm:$0xf]
        %v741 = vld [vmem:[%s685 + $0x14] sm:$0xf]
        %v742 = vld [vmem:[%s685 + $0x18] sm:$0xf]
        %v743 = vld [vmem:[%s685 + $0x1c] sm:$0xf]
        %v744 = vld [vmem:[%s619] sm:$0xff]
        %v745 = vld [vmem:[%s619 + $0x8] sm:$0xff]
        %v746 = vld [vmem:[%s619 + $0x10] sm:$0xff]
        %v747 = vld [vmem:[%s619 + $0x18] sm:$0xff]
        %v748 = vld [vmem:[%s619 + $0x20] sm:$0xff]
        %v749 = vld [vmem:[%s619 + $0x28] sm:$0xff]
        %v750 = vld [vmem:[%s619 + $0x30] sm:$0xff]
        %v751 = vld [vmem:[%s619 + $0x38] sm:$0xff]
        %v752 = vld [vmem:[%s619 + $0x40] sm:$0xff]
        %v753 = vld [vmem:[%s619 + $0x48] sm:$0xff]
        %v754 = vld [vmem:[%s619 + $0x50] sm:$0xff]
        %v755 = vld [vmem:[%s619 + $0x58] sm:$0xff]
        %v756 = vld [vmem:[%s619 + $0x60] sm:$0x33]
        %v757 = vld [vmem:[%s692] sm:$0xff]
        %v758 = vld [vmem:[%s692 + $0x8] sm:$0xf]
        %v759 = vld [vmem:[%s692 + $0xc] sm:$0xff]
        %v760 = vld [vmem:[%s692 + $0x14] sm:$0xf]
        %v761 = vld [vmem:[%s692 + $0x18] sm:$0xff]
        %v762 = vld [vmem:[%s692 + $0x20] sm:$0xf]
        %v763 = vld [vmem:[%s692 + $0x24] sm:$0xff]
        %v764 = vld [vmem:[%s692 + $0x2c] sm:$0xf]
        %v765 = vld [vmem:[%s692 + $0x30] sm:$0xff]
        %v766 = vld [vmem:[%s692 + $0x38] sm:$0xf]
        %v767 = vld [vmem:[%s692 + $0x3c] sm:$0xff]
        %v768 = vld [vmem:[%s692 + $0x44] sm:$0xf]
        %v769 = vld [vmem:[%s692 + $0x48] sm:$0xff]
        %v770 = vld [vmem:[%s692 + $0x50] sm:$0xf]
        %v771 = vld [vmem:[%s692 + $0x54] sm:$0xff]
        %v772 = vld [vmem:[%s692 + $0x5c] sm:$0xf]
        %v773 = vld [vmem:[%s626] sm:$0xff]
        %v774 = vld [vmem:[%s626 + $0x8] sm:$0xff]
        %v775 = vld [vmem:[%s626 + $0x10] sm:$0xff]
        %v776 = vld [vmem:[%s626 + $0x18] sm:$0xff]
        %v777 = vld [vmem:[%s626 + $0x20] sm:$0xff]
        %v778 = vld [vmem:[%s626 + $0x28] sm:$0xff]
        %v779 = vld [vmem:[%s626 + $0x30] sm:$0xff]
        %v780 = vld [vmem:[%s626 + $0x38] sm:$0xff]
        %v781 = vld [vmem:[%s626 + $0x40] sm:$0xff]
        %v782 = vld [vmem:[%s626 + $0x48] sm:$0xff]
        %v783 = vld [vmem:[%s626 + $0x50] sm:$0xff]
        %v784 = vld [vmem:[%s626 + $0x58] sm:$0xff]
        %v785 = vld [vmem:[%s626 + $0x60] sm:$0xff]
        %v786 = vld [vmem:[%s626 + $0x68] sm:$0xff]
        %v787 = vld [vmem:[%s626 + $0x70] sm:$0xff]
        %v788 = vld [vmem:[%s626 + $0x78] sm:$0xff]
        %v789 = vld [vmem:[%s626 + $0x80] sm:$0xff]
        %v790 = vld [vmem:[%s626 + $0x88] sm:$0xff]
        %v791 = vld [vmem:[%s626 + $0x90] sm:$0xff]
        %v792 = vld [vmem:[%s626 + $0x98] sm:$0xff]
        %v793 = vld [vmem:[%s626 + $0xa0] sm:$0xff]
        %v794 = vld [vmem:[%s626 + $0xa8] sm:$0xff]
        %v795 = vld [vmem:[%s626 + $0xb0] sm:$0xff]
        %v796 = vld [vmem:[%s626 + $0xb8] sm:$0xff]
        %v797 = vld [vmem:[%s626 + $0xc0] sm:$0xff]
        %v798 = vld [vmem:[%s626 + $0xc8] sm:$0xff]
        %v799 = vld [vmem:[%s626 + $0xd0] sm:$0xff]
        %v800 = vld [vmem:[%s626 + $0xd8] sm:$0xff]
        %v801 = vld [vmem:[%s626 + $0xe0] sm:$0xff]
        %v802 = vld [vmem:[%s626 + $0xe8] sm:$0xff]
        %v803 = vld [vmem:[%s626 + $0xf0] sm:$0xff]
        %v804 = vld [vmem:[%s626 + $0xf8] sm:$0xff]
        %v805 = vld [vmem:[%s626 + $0x100] sm:$0xff]
        %v806 = vld [vmem:[%s626 + $0x108] sm:$0xff]
        %v807 = vld [vmem:[%s626 + $0x110] sm:$0xff]
        %v808 = vld [vmem:[%s626 + $0x118] sm:$0xff]
        %v809 = vld [vmem:[%s626 + $0x120] sm:$0xff]
        %v810 = vld [vmem:[%s626 + $0x128] sm:$0xff]
        %v811 = vld [vmem:[%s626 + $0x130] sm:$0xff]
        %v812 = vld [vmem:[%s626 + $0x138] sm:$0xff]
        %v813 = vld [vmem:[%s626 + $0x140] sm:$0xff]
        %v814 = vld [vmem:[%s626 + $0x148] sm:$0xff]
        %v815 = vld [vmem:[%s626 + $0x150] sm:$0xff]
        %v816 = vld [vmem:[%s626 + $0x158] sm:$0xff]
        %v817 = vld [vmem:[%s626 + $0x160] sm:$0xff]
        %v818 = vld [vmem:[%s626 + $0x168] sm:$0xff]
        %v819 = vld [vmem:[%s626 + $0x170] sm:$0xff]
        %v820 = vld [vmem:[%s626 + $0x178] sm:$0xff]
        %v837 = vunpack.c.l.b16 %v757
        %v838 = vunpack.c.h.b16 %v757
        %v839 = vunpack.c.l.b16 %v758
        %v840 = vunpack.c.l.b16 %v759
        %v841 = vunpack.c.h.b16 %v759
        %v842 = vunpack.c.l.b16 %v760
        %v843 = vunpack.c.l.b16 %v761
        %v844 = vunpack.c.h.b16 %v761
        %v845 = vunpack.c.l.b16 %v762
        %v846 = vunpack.c.l.b16 %v763
        %v847 = vunpack.c.h.b16 %v763
        %v848 = vunpack.c.l.b16 %v764
        %v849 = vunpack.c.l.b16 %v765
        %v850 = vunpack.c.h.b16 %v765
        %v851 = vunpack.c.l.b16 %v766
        %v852 = vunpack.c.l.b16 %v767
        %v853 = vunpack.c.h.b16 %v767
        %v854 = vunpack.c.l.b16 %v768
        %v855 = vunpack.c.l.b16 %v769
        %v856 = vunpack.c.h.b16 %v769
        %v857 = vunpack.c.l.b16 %v770
        %v858 = vunpack.c.l.b16 %v771
        %v859 = vunpack.c.h.b16 %v771
        %v860 = vunpack.c.l.b16 %v772
        %v861 = vpack.c.b16 %v840, %v837
        %v862 = vpack.c.b16 %v841, %v838
        %v863 = vpack.c.b16 %v842, %v839
        %v864 = vpack.c.b16 %v846, %v843
        %v865 = vpack.c.b16 %v847, %v844
        %v866 = vpack.c.b16 %v848, %v845
        %v867 = vpack.c.b16 %v852, %v849
        %v868 = vpack.c.b16 %v853, %v850
        %v869 = vpack.c.b16 %v854, %v851
        %v870 = vpack.c.b16 %v858, %v855
        %v871 = vpack.c.b16 %v859, %v856
        %v872 = vpack.c.b16 %v860, %v857
        %v933 = vunpack.c.l.b16 %v773
        %v934 = vunpack.c.h.b16 %v773
        %v935 = vunpack.c.l.b16 %v774
        %v936 = vunpack.c.h.b16 %v774
        %v937 = vunpack.c.l.b16 %v775
        %v938 = vunpack.c.h.b16 %v775
        %v939 = vunpack.c.l.b16 %v776
        %v940 = vunpack.c.h.b16 %v776
        %v941 = vunpack.c.l.b16 %v777
        %v942 = vunpack.c.h.b16 %v777
        %v943 = vunpack.c.l.b16 %v778
        %v944 = vunpack.c.h.b16 %v778
        %v945 = vunpack.c.l.b16 %v779
        %v946 = vunpack.c.h.b16 %v779
        %v947 = vunpack.c.l.b16 %v780
        %v948 = vunpack.c.h.b16 %v780
        %v949 = vunpack.c.l.b16 %v781
        %v950 = vunpack.c.h.b16 %v781
        %v951 = vunpack.c.l.b16 %v782
        %v952 = vunpack.c.h.b16 %v782
        %v953 = vunpack.c.l.b16 %v783
        %v954 = vunpack.c.h.b16 %v783
        %v955 = vunpack.c.l.b16 %v784
        %v956 = vunpack.c.h.b16 %v784
        %v957 = vunpack.c.l.b16 %v785
        %v958 = vunpack.c.h.b16 %v785
        %v959 = vunpack.c.l.b16 %v786
        %v960 = vunpack.c.h.b16 %v786
        %v961 = vunpack.c.l.b16 %v787
        %v962 = vunpack.c.h.b16 %v787
        %v963 = vunpack.c.l.b16 %v788
        %v964 = vunpack.c.h.b16 %v788
        %v965 = vunpack.c.l.b16 %v789
        %v966 = vunpack.c.h.b16 %v789
        %v967 = vunpack.c.l.b16 %v790
        %v968 = vunpack.c.h.b16 %v790
        %v969 = vunpack.c.l.b16 %v791
        %v970 = vunpack.c.h.b16 %v791
        %v971 = vunpack.c.l.b16 %v792
        %v972 = vunpack.c.h.b16 %v792
        %v973 = vunpack.c.l.b16 %v793
        %v974 = vunpack.c.h.b16 %v793
        %v975 = vunpack.c.l.b16 %v794
        %v976 = vunpack.c.h.b16 %v794
        %v977 = vunpack.c.l.b16 %v795
        %v978 = vunpack.c.h.b16 %v795
        %v979 = vunpack.c.l.b16 %v796
        %v980 = vunpack.c.h.b16 %v796
        %v981 = vunpack.c.l.b16 %v797
        %v982 = vunpack.c.h.b16 %v797
        %v983 = vunpack.c.l.b16 %v798
        %v984 = vunpack.c.h.b16 %v798
        %v985 = vunpack.c.l.b16 %v799
        %v986 = vunpack.c.h.b16 %v799
        %v987 = vunpack.c.l.b16 %v800
        %v988 = vunpack.c.h.b16 %v800
        %v989 = vunpack.c.l.b16 %v801
        %v990 = vunpack.c.h.b16 %v801
        %v991 = vunpack.c.l.b16 %v802
        %v992 = vunpack.c.h.b16 %v802
        %v993 = vunpack.c.l.b16 %v803
        %v994 = vunpack.c.h.b16 %v803
        %v995 = vunpack.c.l.b16 %v804
        %v996 = vunpack.c.h.b16 %v804
        %v997 = vunpack.c.l.b16 %v805
        %v998 = vunpack.c.h.b16 %v805
        %v999 = vunpack.c.l.b16 %v806
        %v1000 = vunpack.c.h.b16 %v806
        %v1001 = vunpack.c.l.b16 %v807
        %v1002 = vunpack.c.h.b16 %v807
        %v1003 = vunpack.c.l.b16 %v808
        %v1004 = vunpack.c.h.b16 %v808
        %v1005 = vunpack.c.l.b16 %v809
        %v1006 = vunpack.c.h.b16 %v809
        %v1007 = vunpack.c.l.b16 %v810
        %v1008 = vunpack.c.h.b16 %v810
        %v1009 = vunpack.c.l.b16 %v811
        %v1010 = vunpack.c.h.b16 %v811
        %v1011 = vunpack.c.l.b16 %v812
        %v1012 = vunpack.c.h.b16 %v812
        %v1013 = vunpack.c.l.b16 %v813
        %v1014 = vunpack.c.h.b16 %v813
        %v1015 = vunpack.c.l.b16 %v814
        %v1016 = vunpack.c.h.b16 %v814
        %v1017 = vunpack.c.l.b16 %v815
        %v1018 = vunpack.c.h.b16 %v815
        %v1019 = vunpack.c.l.b16 %v816
        %v1020 = vunpack.c.h.b16 %v816
        %v1021 = vunpack.c.l.b16 %v817
        %v1022 = vunpack.c.h.b16 %v817
        %v1023 = vunpack.c.l.b16 %v818
        %v1024 = vunpack.c.h.b16 %v818
        %v1025 = vunpack.c.l.b16 %v819
        %v1026 = vunpack.c.h.b16 %v819
        %v1027 = vunpack.c.l.b16 %v820
        %v1028 = vunpack.c.h.b16 %v820
        %v1029 = vpack.c.b16 %v935, %v933
        %v1030 = vpack.c.b16 %v936, %v934
        %v1031 = vpack.c.b16 %v939, %v937
        %v1032 = vpack.c.b16 %v940, %v938
        %v1033 = vpack.c.b16 %v943, %v941
        %v1034 = vpack.c.b16 %v944, %v942
        %v1035 = vpack.c.b16 %v947, %v945
        %v1036 = vpack.c.b16 %v948, %v946
        %v1037 = vpack.c.b16 %v951, %v949
        %v1038 = vpack.c.b16 %v952, %v950
        %v1039 = vpack.c.b16 %v955, %v953
        %v1040 = vpack.c.b16 %v956, %v954
        %v1041 = vpack.c.b16 %v959, %v957
        %v1042 = vpack.c.b16 %v960, %v958
        %v1043 = vpack.c.b16 %v963, %v961
        %v1044 = vpack.c.b16 %v964, %v962
        %v1045 = vpack.c.b16 %v967, %v965
        %v1046 = vpack.c.b16 %v968, %v966
        %v1047 = vpack.c.b16 %v971, %v969
        %v1048 = vpack.c.b16 %v972, %v970
        %v1049 = vpack.c.b16 %v975, %v973
        %v1050 = vpack.c.b16 %v976, %v974
        %v1051 = vpack.c.b16 %v979, %v977
        %v1052 = vpack.c.b16 %v980, %v978
        %v1053 = vpack.c.b16 %v983, %v981
        %v1054 = vpack.c.b16 %v984, %v982
        %v1055 = vpack.c.b16 %v987, %v985
        %v1056 = vpack.c.b16 %v988, %v986
        %v1057 = vpack.c.b16 %v991, %v989
        %v1058 = vpack.c.b16 %v992, %v990
        %v1059 = vpack.c.b16 %v995, %v993
        %v1060 = vpack.c.b16 %v996, %v994
        %v1061 = vpack.c.b16 %v999, %v997
        %v1062 = vpack.c.b16 %v1000, %v998
        %v1063 = vpack.c.b16 %v1003, %v1001
        %v1064 = vpack.c.b16 %v1004, %v1002
        %v1065 = vpack.c.b16 %v1007, %v1005
        %v1066 = vpack.c.b16 %v1008, %v1006
        %v1067 = vpack.c.b16 %v1011, %v1009
        %v1068 = vpack.c.b16 %v1012, %v1010
        %v1069 = vpack.c.b16 %v1015, %v1013
        %v1070 = vpack.c.b16 %v1016, %v1014
        %v1071 = vpack.c.b16 %v1019, %v1017
        %v1072 = vpack.c.b16 %v1020, %v1018
        %v1073 = vpack.c.b16 %v1023, %v1021
        %v1074 = vpack.c.b16 %v1024, %v1022
        %v1075 = vpack.c.b16 %v1027, %v1025
        %v1076 = vpack.c.b16 %v1028, %v1026
        %1125 = vmatpush.bf16.msra.mxu0 %v1043
        %1126 = vmatpush.bf16.msra.mxu0 %v1041
        %1127 = vmatpush.bf16.msra.mxu0 %v1039
        %1128 = vmatpush.bf16.msra.mxu0 %v1037
        %1129 = vmatpush.bf16.msra.mxu0 %v1035
        %1130 = vmatpush.bf16.msra.mxu0 %v1033
        %1131 = vmatpush.bf16.msra.mxu0 %v1031
        %1132 = vmatpush.bf16.msra.mxu0 %v1029
        %1133 = vmatmul.bf16.gmra.mxu0 %v861
        %v1134 = vpop.f32.mrf.mxu0
        %v1135 = vadd.f32 0.0, %v1134
        %v1136 = vpop.f32.mrf.mxu0
        %v1137 = vadd.f32 0.0, %v1136
        %1138 = vmatmul.bf16.gmra.mxu0 %v864
        %v1139 = vpop.f32.mrf.mxu0
        %v1140 = vadd.f32 0.0, %v1139
        %v1141 = vpop.f32.mrf.mxu0
        %v1142 = vadd.f32 0.0, %v1141
        %1143 = vmatmul.bf16.gmra.mxu0 %v867
        %v1144 = vpop.f32.mrf.mxu0
        %v1145 = vadd.f32 0.0, %v1144
        %v1146 = vpop.f32.mrf.mxu0
        %v1147 = vadd.f32 0.0, %v1146
        %1148 = vmatmul.bf16.gmra.mxu0 %v870
        %v1149 = vpop.f32.mrf.mxu0
        %v1150 = vadd.f32 0.0, %v1149
        %v1151 = vpop.f32.mrf.mxu0
        %v1152 = vadd.f32 0.0, %v1151
        %1153 = vdwg.mxu0
        %1154 = vmatpush.bf16.msra.mxu0 %v1059
        %1155 = vmatpush.bf16.msra.mxu0 %v1057
        %1156 = vmatpush.bf16.msra.mxu0 %v1055
        %1157 = vmatpush.bf16.msra.mxu0 %v1053
        %1158 = vmatpush.bf16.msra.mxu0 %v1051
        %1159 = vmatpush.bf16.msra.mxu0 %v1049
        %1160 = vmatpush.bf16.msra.mxu0 %v1047
        %1161 = vmatpush.bf16.msra.mxu0 %v1045
        %1162 = vmatmul.bf16.gmra.mxu0 %v862
        %v1163 = vpop.f32.mrf.mxu0
        %v1164 = vadd.f32 %v1135, %v1163
        %v1165 = vpop.f32.mrf.mxu0
        %v1166 = vadd.f32 %v1137, %v1165
        %1167 = vmatmul.bf16.gmra.mxu0 %v865
        %v1168 = vpop.f32.mrf.mxu0
        %v1169 = vadd.f32 %v1140, %v1168
        %v1170 = vpop.f32.mrf.mxu0
        %v1171 = vadd.f32 %v1142, %v1170
        %1172 = vmatmul.bf16.gmra.mxu0 %v868
        %v1173 = vpop.f32.mrf.mxu0
        %v1174 = vadd.f32 %v1145, %v1173
        %v1175 = vpop.f32.mrf.mxu0
        %v1176 = vadd.f32 %v1147, %v1175
        %1177 = vmatmul.bf16.gmra.mxu0 %v871
        %v1178 = vpop.f32.mrf.mxu0
        %v1179 = vadd.f32 %v1150, %v1178
        %v1180 = vpop.f32.mrf.mxu0
        %v1181 = vadd.f32 %v1152, %v1180
        %1182 = vdwg.mxu0
        %1183 = vmatpush.bf16.msra.mxu0 %v1075
        %1184 = vmatpush.bf16.msra.mxu0 %v1073
        %1185 = vmatpush.bf16.msra.mxu0 %v1071
        %1186 = vmatpush.bf16.msra.mxu0 %v1069
        %1187 = vmatpush.bf16.msra.mxu0 %v1067
        %1188 = vmatpush.bf16.msra.mxu0 %v1065
        %1189 = vmatpush.bf16.msra.mxu0 %v1063
        %1190 = vmatpush.bf16.msra.mxu0 %v1061
        %1191 = vmatmul.bf16.gmra.mxu0 %v863
        %v1192 = vpop.f32.mrf.mxu0
        %v1193 = vadd.f32 %v1164, %v1192
        %v1194 = vpop.f32.mrf.mxu0
        %v1195 = vadd.f32 %v1166, %v1194
        %1196 = vmatmul.bf16.gmra.mxu0 %v866
        %v1197 = vpop.f32.mrf.mxu0
        %v1198 = vadd.f32 %v1169, %v1197
        %v1199 = vpop.f32.mrf.mxu0
        %v1200 = vadd.f32 %v1171, %v1199
        %1201 = vmatmul.bf16.gmra.mxu0 %v869
        %v1202 = vpop.f32.mrf.mxu0
        %v1203 = vadd.f32 %v1174, %v1202
        %v1204 = vpop.f32.mrf.mxu0
        %v1205 = vadd.f32 %v1176, %v1204
        %1206 = vmatmul.bf16.gmra.mxu0 %v872
        %v1207 = vpop.f32.mrf.mxu0
        %v1208 = vadd.f32 %v1179, %v1207
        %v1209 = vpop.f32.mrf.mxu0
        %v1210 = vadd.f32 %v1181, %v1209
        %1211 = vdwg.mxu0
        %1212 = vmatpush.bf16.msra.mxu0 %v1044
        %1213 = vmatpush.bf16.msra.mxu0 %v1042
        %1214 = vmatpush.bf16.msra.mxu0 %v1040
        %1215 = vmatpush.bf16.msra.mxu0 %v1038
        %1216 = vmatpush.bf16.msra.mxu0 %v1036
        %1217 = vmatpush.bf16.msra.mxu0 %v1034
        %1218 = vmatpush.bf16.msra.mxu0 %v1032
        %1219 = vmatpush.bf16.msra.mxu0 %v1030
        %1220 = vmatmul.bf16.gmra.mxu0 %v861
        %v1221 = vpop.f32.mrf.mxu0
        %v1222 = vadd.f32 0.0, %v1221
        %v1223 = vpop.f32.mrf.mxu0
        %v1224 = vadd.f32 0.0, %v1223
        %1225 = vmatmul.bf16.gmra.mxu0 %v864
        %v1226 = vpop.f32.mrf.mxu0
        %v1227 = vadd.f32 0.0, %v1226
        %v1228 = vpop.f32.mrf.mxu0
        %v1229 = vadd.f32 0.0, %v1228
        %1230 = vmatmul.bf16.gmra.mxu0 %v867
        %v1231 = vpop.f32.mrf.mxu0
        %v1232 = vadd.f32 0.0, %v1231
        %v1233 = vpop.f32.mrf.mxu0
        %v1234 = vadd.f32 0.0, %v1233
        %1235 = vmatmul.bf16.gmra.mxu0 %v870
        %v1236 = vpop.f32.mrf.mxu0
        %v1237 = vadd.f32 0.0, %v1236
        %v1238 = vpop.f32.mrf.mxu0
        %v1239 = vadd.f32 0.0, %v1238
        %1240 = vdwg.mxu0
        %1241 = vmatpush.bf16.msra.mxu0 %v1060
        %1242 = vmatpush.bf16.msra.mxu0 %v1058
        %1243 = vmatpush.bf16.msra.mxu0 %v1056
        %1244 = vmatpush.bf16.msra.mxu0 %v1054
        %1245 = vmatpush.bf16.msra.mxu0 %v1052
        %1246 = vmatpush.bf16.msra.mxu0 %v1050
        %1247 = vmatpush.bf16.msra.mxu0 %v1048
        %1248 = vmatpush.bf16.msra.mxu0 %v1046
        %1249 = vmatmul.bf16.gmra.mxu0 %v862
        %v1250 = vpop.f32.mrf.mxu0
        %v1251 = vadd.f32 %v1222, %v1250
        %v1252 = vpop.f32.mrf.mxu0
        %v1253 = vadd.f32 %v1224, %v1252
        %1254 = vmatmul.bf16.gmra.mxu0 %v865
        %v1255 = vpop.f32.mrf.mxu0
        %v1256 = vadd.f32 %v1227, %v1255
        %v1257 = vpop.f32.mrf.mxu0
        %v1258 = vadd.f32 %v1229, %v1257
        %1259 = vmatmul.bf16.gmra.mxu0 %v868
        %v1260 = vpop.f32.mrf.mxu0
        %v1261 = vadd.f32 %v1232, %v1260
        %v1262 = vpop.f32.mrf.mxu0
        %v1263 = vadd.f32 %v1234, %v1262
        %1264 = vmatmul.bf16.gmra.mxu0 %v871
        %v1265 = vpop.f32.mrf.mxu0
        %v1266 = vadd.f32 %v1237, %v1265
        %v1267 = vpop.f32.mrf.mxu0
        %v1268 = vadd.f32 %v1239, %v1267
        %1269 = vdwg.mxu0
        %1270 = vmatpush.bf16.msra.mxu0 %v1076
        %1271 = vmatpush.bf16.msra.mxu0 %v1074
        %1272 = vmatpush.bf16.msra.mxu0 %v1072
        %1273 = vmatpush.bf16.msra.mxu0 %v1070
        %1274 = vmatpush.bf16.msra.mxu0 %v1068
        %1275 = vmatpush.bf16.msra.mxu0 %v1066
        %1276 = vmatpush.bf16.msra.mxu0 %v1064
        %1277 = vmatpush.bf16.msra.mxu0 %v1062
        %1278 = vmatmul.bf16.gmra.mxu0 %v863
        %v1279 = vpop.f32.mrf.mxu0
        %v1280 = vadd.f32 %v1251, %v1279
        %v1281 = vpop.f32.mrf.mxu0
        %v1282 = vadd.f32 %v1253, %v1281
        %1283 = vmatmul.bf16.gmra.mxu0 %v866
        %v1284 = vpop.f32.mrf.mxu0
        %v1285 = vadd.f32 %v1256, %v1284
        %v1286 = vpop.f32.mrf.mxu0
        %v1287 = vadd.f32 %v1258, %v1286
        %1288 = vmatmul.bf16.gmra.mxu0 %v869
        %v1289 = vpop.f32.mrf.mxu0
        %v1290 = vadd.f32 %v1261, %v1289
        %v1291 = vpop.f32.mrf.mxu0
        %v1292 = vadd.f32 %v1263, %v1291
        %1293 = vmatmul.bf16.gmra.mxu0 %v872
        %v1294 = vpop.f32.mrf.mxu0
        %v1295 = vadd.f32 %v1266, %v1294
        %v1296 = vpop.f32.mrf.mxu0
        %v1297 = vadd.f32 %v1268, %v1296
        %1298 = vdwg.mxu0
        %v1307 = vunpack.c.l.b16 %v736
        %v1308 = vunpack.c.l.b16 %v737
        %v1309 = vunpack.c.l.b16 %v738
        %v1310 = vunpack.c.l.b16 %v739
        %v1311 = vunpack.c.l.b16 %v740
        %v1312 = vunpack.c.l.b16 %v741
        %v1313 = vunpack.c.l.b16 %v742
        %v1314 = vunpack.c.l.b16 %v743
        %v1315 = vpack.c.b16 %v1308, %v1307
        %v1316 = vpack.c.b16 %v1310, %v1309
        %v1317 = vpack.c.b16 %v1312, %v1311
        %v1318 = vpack.c.b16 %v1314, %v1313
        %v1332 = vunpack.c.l.b16 %v744
        %v1333 = vunpack.c.h.b16 %v744
        %v1334 = vunpack.c.l.b16 %v745
        %v1335 = vunpack.c.h.b16 %v745
        %v1336 = vunpack.c.l.b16 %v746
        %v1337 = vunpack.c.h.b16 %v746
        %v1338 = vunpack.c.l.b16 %v747
        %v1339 = vunpack.c.h.b16 %v747
        %v1340 = vunpack.c.l.b16 %v748
        %v1341 = vunpack.c.h.b16 %v748
        %v1342 = vunpack.c.l.b16 %v749
        %v1343 = vunpack.c.h.b16 %v749
        %v1344 = vunpack.c.l.b16 %v750
        %v1345 = vunpack.c.h.b16 %v750
        %v1346 = vunpack.c.l.b16 %v751
        %v1347 = vunpack.c.h.b16 %v751
        %v1348 = vunpack.c.l.b16 %v752
        %v1349 = vunpack.c.h.b16 %v752
        %v1350 = vunpack.c.l.b16 %v753
        %v1351 = vunpack.c.h.b16 %v753
        %v1352 = vunpack.c.l.b16 %v754
        %v1353 = vunpack.c.h.b16 %v754
        %v1354 = vunpack.c.l.b16 %v755
        %v1355 = vunpack.c.h.b16 %v755
        %v1356 = vunpack.c.l.b16 %v756
        %v1357 = vunpack.c.h.b16 %v756
        %v1358 = vpack.c.b16 %v1334, %v1332
        %v1359 = vpack.c.b16 %v1335, %v1333
        %v1360 = vpack.c.b16 %v1338, %v1336
        %v1361 = vpack.c.b16 %v1339, %v1337
        %v1362 = vpack.c.b16 %v1342, %v1340
        %v1363 = vpack.c.b16 %v1343, %v1341
        %v1364 = vpack.c.b16 %v1346, %v1344
        %v1365 = vpack.c.b16 %v1347, %v1345
        %v1366 = vpack.c.b16 %v1350, %v1348
        %v1367 = vpack.c.b16 %v1351, %v1349
        %v1368 = vpack.c.b16 %v1354, %v1352
        %v1369 = vpack.c.b16 %v1355, %v1353
        %v1370 = vpack.c.b16 %v1356, %v1356
        %v1371 = vpack.c.b16 %v1357, %v1357
        %vm1384 = vcmask 818176
        %v1386 = vsel %vm1384, %v1315, 0
        %v1389 = vsel %vm1384, %v1316, 0
        %v1392 = vsel %vm1384, %v1317, 0
        %v1395 = vsel %vm1384, %v1318, 0
        %vm1397 = vcmask 1041408
        %v1399 = vsel %vm1397, %v1370, 0
        %v1402 = vsel %vm1397, %v1371, 0
        %1404 = vmatpush.bf16.msra.mxu0 0
        %1405 = vmatpush.bf16.msra.mxu0 %v1399
        %1406 = vmatpush.bf16.msra.mxu0 %v1368
        %1407 = vmatpush.bf16.msra.mxu0 %v1366
        %1408 = vmatpush.bf16.msra.mxu0 %v1364
        %1409 = vmatpush.bf16.msra.mxu0 %v1362
        %1410 = vmatpush.bf16.msra.mxu0 %v1360
        %1411 = vmatpush.bf16.msra.mxu0 %v1358
        %1412 = vmatmul.bf16.gmra.mxu0 %v1386
        %v1413 = vpop.f32.mrf.mxu0
        %v1414 = vadd.f32 %v1193, %v1413
        %v1415 = vpop.f32.mrf.mxu0
        %v1416 = vadd.f32 %v1195, %v1415
        %1417 = vmatmul.bf16.gmra.mxu0 %v1389
        %v1418 = vpop.f32.mrf.mxu0
        %v1419 = vadd.f32 %v1198, %v1418
        %v1420 = vpop.f32.mrf.mxu0
        %v1421 = vadd.f32 %v1200, %v1420
        %1422 = vmatmul.bf16.gmra.mxu0 %v1392
        %v1423 = vpop.f32.mrf.mxu0
        %v1424 = vadd.f32 %v1203, %v1423
        %v1425 = vpop.f32.mrf.mxu0
        %v1426 = vadd.f32 %v1205, %v1425
        %1427 = vmatmul.bf16.gmra.mxu0 %v1395
        %v1428 = vpop.f32.mrf.mxu0
        %v1429 = vadd.f32 %v1208, %v1428
        %v1430 = vpop.f32.mrf.mxu0
        %v1431 = vadd.f32 %v1210, %v1430
        %1432 = vdwg.mxu0
        %1433 = vmatpush.bf16.msra.mxu0 0
        %1434 = vmatpush.bf16.msra.mxu0 %v1402
        %1435 = vmatpush.bf16.msra.mxu0 %v1369
        %1436 = vmatpush.bf16.msra.mxu0 %v1367
        %1437 = vmatpush.bf16.msra.mxu0 %v1365
        %1438 = vmatpush.bf16.msra.mxu0 %v1363
        %1439 = vmatpush.bf16.msra.mxu0 %v1361
        %1440 = vmatpush.bf16.msra.mxu0 %v1359
        %1441 = vmatmul.bf16.gmra.mxu0 %v1386
        %v1442 = vpop.f32.mrf.mxu0
        %v1443 = vadd.f32 %v1280, %v1442
        %v1444 = vpop.f32.mrf.mxu0
        %v1445 = vadd.f32 %v1282, %v1444
        %1446 = vmatmul.bf16.gmra.mxu0 %v1389
        %v1447 = vpop.f32.mrf.mxu0
        %v1448 = vadd.f32 %v1285, %v1447
        %v1449 = vpop.f32.mrf.mxu0
        %v1450 = vadd.f32 %v1287, %v1449
        %1451 = vmatmul.bf16.gmra.mxu0 %v1392
        %v1452 = vpop.f32.mrf.mxu0
        %v1453 = vadd.f32 %v1290, %v1452
        %v1454 = vpop.f32.mrf.mxu0
        %v1455 = vadd.f32 %v1292, %v1454
        %1456 = vmatmul.bf16.gmra.mxu0 %v1395
        %v1457 = vpop.f32.mrf.mxu0
        %v1458 = vadd.f32 %v1295, %v1457
        %v1459 = vpop.f32.mrf.mxu0
        %v1460 = vadd.f32 %v1297, %v1459
        %1461 = vdwg.mxu0
        %v1462 = vld [vmem:[%s699] sm:$0x3]
        %v1463 = vunpack.c.l.bf16 %v1462
        %v1465 = vperm.slane %v1463, 0
        %v1466 = vperm.slane %v1463, 2
        %v1469 = vperm.slane %v1465, 0
        %v1470 = vperm.slane %v1466, 0
        %v1471 = vadd.f32 %v1414, %v1469
        %v1472 = vadd.f32 %v1443, %v1470
        %v1473 = vadd.f32 %v1416, %v1469
        %v1474 = vadd.f32 %v1445, %v1470
        %v1475 = vadd.f32 %v1419, %v1469
        %v1476 = vadd.f32 %v1448, %v1470
        %v1477 = vadd.f32 %v1421, %v1469
        %v1478 = vadd.f32 %v1450, %v1470
        %v1479 = vadd.f32 %v1424, %v1469
        %v1480 = vadd.f32 %v1453, %v1470
        %v1481 = vadd.f32 %v1426, %v1469
        %v1482 = vadd.f32 %v1455, %v1470
        %v1483 = vadd.f32 %v1429, %v1469
        %v1484 = vadd.f32 %v1458, %v1470
        %v1485 = vadd.f32 %v1431, %v1469
        %v1486 = vadd.f32 %v1460, %v1470
        %vm1487 = vcmp.gt.f32.partialorder %v1471, 0.0
        %vm1488 = vcmp.gt.f32.partialorder %v1472, 0.0
        %vm1489 = vcmp.gt.f32.partialorder %v1473, 0.0
        %vm1490 = vcmp.gt.f32.partialorder %v1474, 0.0
        %vm1491 = vcmp.gt.f32.partialorder %v1475, 0.0
        %vm1492 = vcmp.gt.f32.partialorder %v1476, 0.0
        %vm1493 = vcmp.gt.f32.partialorder %v1477, 0.0
        %vm1494 = vcmp.gt.f32.partialorder %v1478, 0.0
        %vm1495 = vcmp.gt.f32.partialorder %v1479, 0.0
        %vm1496 = vcmp.gt.f32.partialorder %v1480, 0.0
        %vm1497 = vcmp.gt.f32.partialorder %v1481, 0.0
        %vm1498 = vcmp.gt.f32.partialorder %v1482, 0.0
        %vm1499 = vcmp.gt.f32.partialorder %v1483, 0.0
        %vm1500 = vcmp.gt.f32.partialorder %v1484, 0.0
        %vm1501 = vcmp.gt.f32.partialorder %v1485, 0.0
        %vm1502 = vcmp.gt.f32.partialorder %v1486, 0.0
        %v1503 = vmul.f32 %v1471, 0.01
        %v1504 = vmul.f32 %v1472, 0.01
        %v1505 = vmul.f32 %v1473, 0.01
        %v1506 = vmul.f32 %v1474, 0.01
        %v1507 = vmul.f32 %v1475, 0.01
        %v1508 = vmul.f32 %v1476, 0.01
        %v1509 = vmul.f32 %v1477, 0.01
        %v1510 = vmul.f32 %v1478, 0.01
        %v1511 = vmul.f32 %v1479, 0.01
        %v1512 = vmul.f32 %v1480, 0.01
        %v1513 = vmul.f32 %v1481, 0.01
        %v1514 = vmul.f32 %v1482, 0.01
        %v1515 = vmul.f32 %v1483, 0.01
        %v1516 = vmul.f32 %v1484, 0.01
        %v1517 = vmul.f32 %v1485, 0.01
        %v1518 = vmul.f32 %v1486, 0.01
        %v1519 = vsel %vm1487, %v1471, %v1503
        %v1520 = vsel %vm1488, %v1472, %v1504
        %v1521 = vsel %vm1489, %v1473, %v1505
        %v1522 = vsel %vm1490, %v1474, %v1506
        %v1523 = vsel %vm1491, %v1475, %v1507
        %v1524 = vsel %vm1492, %v1476, %v1508
        %v1525 = vsel %vm1493, %v1477, %v1509
        %v1526 = vsel %vm1494, %v1478, %v1510
        %v1527 = vsel %vm1495, %v1479, %v1511
        %v1528 = vsel %vm1496, %v1480, %v1512
        %v1529 = vsel %vm1497, %v1481, %v1513
        %v1530 = vsel %vm1498, %v1482, %v1514
        %v1531 = vsel %vm1499, %v1483, %v1515
        %v1532 = vsel %vm1500, %v1484, %v1516
        %v1533 = vsel %vm1501, %v1485, %v1517
        %v1534 = vsel %vm1502, %v1486, %v1518
        %v1535 = vld [vmem:[#allocation2] sm:$0xff]
        %v1536 = vld [vmem:[#allocation2 + $0x8] sm:$0xff]
        %v1537 = vld [vmem:[#allocation2 + $0x10] sm:$0xff]
        %v1538 = vld [vmem:[#allocation2 + $0x18] sm:$0xff]
        %v1539 = vld [vmem:[#allocation2 + $0x20] sm:$0xff]
        %v1540 = vld [vmem:[#allocation2 + $0x28] sm:$0xff]
        %v1541 = vld [vmem:[#allocation2 + $0x30] sm:$0xff]
        %v1542 = vld [vmem:[#allocation2 + $0x38] sm:$0xff]
        %v1543 = vld [vmem:[#allocation2 + $0x40] sm:$0xff]
        %v1544 = vld [vmem:[#allocation2 + $0x48] sm:$0xff]
        %v1545 = vld [vmem:[#allocation2 + $0x50] sm:$0xff]
        %v1546 = vld [vmem:[#allocation2 + $0x58] sm:$0xff]
        %v1547 = vld [vmem:[#allocation2 + $0x60] sm:$0xff]
        %v1548 = vld [vmem:[#allocation2 + $0x68] sm:$0xff]
        %v1549 = vld [vmem:[#allocation2 + $0x70] sm:$0xff]
        %v1550 = vld [vmem:[#allocation2 + $0x78] sm:$0xff]
        %v1551 = vpack.c.bf16 %v1521, %v1519
        %v1552 = vpack.c.bf16 %v1522, %v1520
        %v1553 = vpack.c.bf16 %v1525, %v1523
        %v1554 = vpack.c.bf16 %v1526, %v1524
        %v1555 = vpack.c.bf16 %v1529, %v1527
        %v1556 = vpack.c.bf16 %v1530, %v1528
        %v1557 = vpack.c.bf16 %v1533, %v1531
        %v1558 = vpack.c.bf16 %v1534, %v1532
        %v1559 = vld [vmem:[%s706] sm:$0xff]
        %v1560 = vld [vmem:[%s706 + $0x8] sm:$0xff]
        %v1561 = vld [vmem:[%s706 + $0x10] sm:$0xff]
        %v1562 = vld [vmem:[%s706 + $0x18] sm:$0xff]
        %v1563 = vld [vmem:[%s706 + $0x20] sm:$0xff]
        %v1564 = vld [vmem:[%s706 + $0x28] sm:$0xff]
        %v1565 = vld [vmem:[%s706 + $0x30] sm:$0xff]
        %v1566 = vld [vmem:[%s706 + $0x38] sm:$0xff]
        %v1567 = vld [vmem:[%s706 + $0x40] sm:$0xff]
        %v1568 = vld [vmem:[%s706 + $0x48] sm:$0xff]
        %v1569 = vld [vmem:[%s706 + $0x50] sm:$0xff]
        %v1570 = vld [vmem:[%s706 + $0x58] sm:$0xff]
        %v1571 = vld [vmem:[%s706 + $0x60] sm:$0xff]
        %v1572 = vld [vmem:[%s706 + $0x68] sm:$0xff]
        %v1573 = vld [vmem:[%s706 + $0x70] sm:$0xff]
        %v1574 = vld [vmem:[%s706 + $0x78] sm:$0xff]
        %v1575 = vld [vmem:[%s706 + $0x80] sm:$0xff]
        %v1576 = vld [vmem:[%s706 + $0x88] sm:$0xff]
        %v1577 = vld [vmem:[%s706 + $0x90] sm:$0xff]
        %v1578 = vld [vmem:[%s706 + $0x98] sm:$0xff]
        %v1579 = vld [vmem:[%s706 + $0xa0] sm:$0xff]
        %v1580 = vld [vmem:[%s706 + $0xa8] sm:$0xff]
        %v1581 = vld [vmem:[%s706 + $0xb0] sm:$0xff]
        %v1582 = vld [vmem:[%s706 + $0xb8] sm:$0xff]
        %v1583 = vld [vmem:[%s706 + $0xc0] sm:$0xff]
        %v1584 = vld [vmem:[%s706 + $0xc8] sm:$0xff]
        %v1585 = vld [vmem:[%s706 + $0xd0] sm:$0xff]
        %v1586 = vld [vmem:[%s706 + $0xd8] sm:$0xff]
        %v1587 = vld [vmem:[%s706 + $0xe0] sm:$0xff]
        %v1588 = vld [vmem:[%s706 + $0xe8] sm:$0xff]
        %v1589 = vld [vmem:[%s706 + $0xf0] sm:$0xff]
        %v1590 = vld [vmem:[%s706 + $0xf8] sm:$0xff]
        %v1623 = vunpack.c.l.b16 %v1559
        %v1624 = vunpack.c.h.b16 %v1559
        %v1625 = vunpack.c.l.b16 %v1560
        %v1626 = vunpack.c.h.b16 %v1560
        %v1627 = vunpack.c.l.b16 %v1561
        %v1628 = vunpack.c.h.b16 %v1561
        %v1629 = vunpack.c.l.b16 %v1562
        %v1630 = vunpack.c.h.b16 %v1562
        %v1631 = vunpack.c.l.b16 %v1563
        %v1632 = vunpack.c.h.b16 %v1563
        %v1633 = vunpack.c.l.b16 %v1564
        %v1634 = vunpack.c.h.b16 %v1564
        %v1635 = vunpack.c.l.b16 %v1565
        %v1636 = vunpack.c.h.b16 %v1565
        %v1637 = vunpack.c.l.b16 %v1566
        %v1638 = vunpack.c.h.b16 %v1566
        %v1639 = vunpack.c.l.b16 %v1567
        %v1640 = vunpack.c.h.b16 %v1567
        %v1641 = vunpack.c.l.b16 %v1568
        %v1642 = vunpack.c.h.b16 %v1568
        %v1643 = vunpack.c.l.b16 %v1569
        %v1644 = vunpack.c.h.b16 %v1569
        %v1645 = vunpack.c.l.b16 %v1570
        %v1646 = vunpack.c.h.b16 %v1570
        %v1647 = vunpack.c.l.b16 %v1571
        %v1648 = vunpack.c.h.b16 %v1571
        %v1649 = vunpack.c.l.b16 %v1572
        %v1650 = vunpack.c.h.b16 %v1572
        %v1651 = vunpack.c.l.b16 %v1573
        %v1652 = vunpack.c.h.b16 %v1573
        %v1653 = vunpack.c.l.b16 %v1574
        %v1654 = vunpack.c.h.b16 %v1574
        %v1655 = vunpack.c.l.b16 %v1575
        %v1656 = vunpack.c.h.b16 %v1575
        %v1657 = vunpack.c.l.b16 %v1576
        %v1658 = vunpack.c.h.b16 %v1576
        %v1659 = vunpack.c.l.b16 %v1577
        %v1660 = vunpack.c.h.b16 %v1577
        %v1661 = vunpack.c.l.b16 %v1578
        %v1662 = vunpack.c.h.b16 %v1578
        %v1663 = vunpack.c.l.b16 %v1579
        %v1664 = vunpack.c.h.b16 %v1579
        %v1665 = vunpack.c.l.b16 %v1580
        %v1666 = vunpack.c.h.b16 %v1580
        %v1667 = vunpack.c.l.b16 %v1581
        %v1668 = vunpack.c.h.b16 %v1581
        %v1669 = vunpack.c.l.b16 %v1582
        %v1670 = vunpack.c.h.b16 %v1582
        %v1671 = vunpack.c.l.b16 %v1583
        %v1672 = vunpack.c.h.b16 %v1583
        %v1673 = vunpack.c.l.b16 %v1584
        %v1674 = vunpack.c.h.b16 %v1584
        %v1675 = vunpack.c.l.b16 %v1585
        %v1676 = vunpack.c.h.b16 %v1585
        %v1677 = vunpack.c.l.b16 %v1586
        %v1678 = vunpack.c.h.b16 %v1586
        %v1679 = vunpack.c.l.b16 %v1587
        %v1680 = vunpack.c.h.b16 %v1587
        %v1681 = vunpack.c.l.b16 %v1588
        %v1682 = vunpack.c.h.b16 %v1588
        %v1683 = vunpack.c.l.b16 %v1589
        %v1684 = vunpack.c.h.b16 %v1589
        %v1685 = vunpack.c.l.b16 %v1590
        %v1686 = vunpack.c.h.b16 %v1590
        %v1687 = vpack.c.b16 %v1625, %v1623
        %v1688 = vpack.c.b16 %v1626, %v1624
        %v1689 = vpack.c.b16 %v1629, %v1627
        %v1690 = vpack.c.b16 %v1630, %v1628
        %v1691 = vpack.c.b16 %v1633, %v1631
        %v1692 = vpack.c.b16 %v1634, %v1632
        %v1693 = vpack.c.b16 %v1637, %v1635
        %v1694 = vpack.c.b16 %v1638, %v1636
        %v1695 = vpack.c.b16 %v1641, %v1639
        %v1696 = vpack.c.b16 %v1642, %v1640
        %v1697 = vpack.c.b16 %v1645, %v1643
        %v1698 = vpack.c.b16 %v1646, %v1644
        %v1699 = vpack.c.b16 %v1649, %v1647
        %v1700 = vpack.c.b16 %v1650, %v1648
        %v1701 = vpack.c.b16 %v1653, %v1651
        %v1702 = vpack.c.b16 %v1654, %v1652
        %v1703 = vpack.c.b16 %v1657, %v1655
        %v1704 = vpack.c.b16 %v1658, %v1656
        %v1705 = vpack.c.b16 %v1661, %v1659
        %v1706 = vpack.c.b16 %v1662, %v1660
        %v1707 = vpack.c.b16 %v1665, %v1663
        %v1708 = vpack.c.b16 %v1666, %v1664
        %v1709 = vpack.c.b16 %v1669, %v1667
        %v1710 = vpack.c.b16 %v1670, %v1668
        %v1711 = vpack.c.b16 %v1673, %v1671
        %v1712 = vpack.c.b16 %v1674, %v1672
        %v1713 = vpack.c.b16 %v1677, %v1675
        %v1714 = vpack.c.b16 %v1678, %v1676
        %v1715 = vpack.c.b16 %v1681, %v1679
        %v1716 = vpack.c.b16 %v1682, %v1680
        %v1717 = vpack.c.b16 %v1685, %v1683
        %v1718 = vpack.c.b16 %v1686, %v1684
        %1751 = vmatpush.bf16.msra.mxu0 %v1701
        %1752 = vmatpush.bf16.msra.mxu0 %v1699
        %1753 = vmatpush.bf16.msra.mxu0 %v1697
        %1754 = vmatpush.bf16.msra.mxu0 %v1695
        %1755 = vmatpush.bf16.msra.mxu0 %v1693
        %1756 = vmatpush.bf16.msra.mxu0 %v1691
        %1757 = vmatpush.bf16.msra.mxu0 %v1689
        %1758 = vmatpush.bf16.msra.mxu0 %v1687
        %1759 = vmatmul.bf16.gmra.mxu0 %v1551
        %v1760 = vpop.f32.mrf.mxu0
        %v1761 = vadd.f32 0.0, %v1760
        %v1762 = vpop.f32.mrf.mxu0
        %v1763 = vadd.f32 0.0, %v1762
        %1764 = vmatmul.bf16.gmra.mxu0 %v1553
        %v1765 = vpop.f32.mrf.mxu0
        %v1766 = vadd.f32 0.0, %v1765
        %v1767 = vpop.f32.mrf.mxu0
        %v1768 = vadd.f32 0.0, %v1767
        %1769 = vmatmul.bf16.gmra.mxu0 %v1555
        %v1770 = vpop.f32.mrf.mxu0
        %v1771 = vadd.f32 0.0, %v1770
        %v1772 = vpop.f32.mrf.mxu0
        %v1773 = vadd.f32 0.0, %v1772
        %1774 = vmatmul.bf16.gmra.mxu0 %v1557
        %v1775 = vpop.f32.mrf.mxu0
        %v1776 = vadd.f32 0.0, %v1775
        %v1777 = vpop.f32.mrf.mxu0
        %v1778 = vadd.f32 0.0, %v1777
        %1779 = vdwg.mxu0
        %1780 = vmatpush.bf16.msra.mxu0 %v1717
        %1781 = vmatpush.bf16.msra.mxu0 %v1715
        %1782 = vmatpush.bf16.msra.mxu0 %v1713
        %1783 = vmatpush.bf16.msra.mxu0 %v1711
        %1784 = vmatpush.bf16.msra.mxu0 %v1709
        %1785 = vmatpush.bf16.msra.mxu0 %v1707
        %1786 = vmatpush.bf16.msra.mxu0 %v1705
        %1787 = vmatpush.bf16.msra.mxu0 %v1703
        %1788 = vmatmul.bf16.gmra.mxu0 %v1552
        %v1789 = vpop.f32.mrf.mxu0
        %v1790 = vadd.f32 %v1761, %v1789
        %v1791 = vpop.f32.mrf.mxu0
        %v1792 = vadd.f32 %v1763, %v1791
        %1793 = vmatmul.bf16.gmra.mxu0 %v1554
        %v1794 = vpop.f32.mrf.mxu0
        %v1795 = vadd.f32 %v1766, %v1794
        %v1796 = vpop.f32.mrf.mxu0
        %v1797 = vadd.f32 %v1768, %v1796
        %1798 = vmatmul.bf16.gmra.mxu0 %v1556
        %v1799 = vpop.f32.mrf.mxu0
        %v1800 = vadd.f32 %v1771, %v1799
        %v1801 = vpop.f32.mrf.mxu0
        %v1802 = vadd.f32 %v1773, %v1801
        %1803 = vmatmul.bf16.gmra.mxu0 %v1558
        %v1804 = vpop.f32.mrf.mxu0
        %v1805 = vadd.f32 %v1776, %v1804
        %v1806 = vpop.f32.mrf.mxu0
        %v1807 = vadd.f32 %v1778, %v1806
        %1808 = vdwg.mxu0
        %1809 = vmatpush.bf16.msra.mxu0 %v1702
        %1810 = vmatpush.bf16.msra.mxu0 %v1700
        %1811 = vmatpush.bf16.msra.mxu0 %v1698
        %1812 = vmatpush.bf16.msra.mxu0 %v1696
        %1813 = vmatpush.bf16.msra.mxu0 %v1694
        %1814 = vmatpush.bf16.msra.mxu0 %v1692
        %1815 = vmatpush.bf16.msra.mxu0 %v1690
        %1816 = vmatpush.bf16.msra.mxu0 %v1688
        %1817 = vmatmul.bf16.gmra.mxu0 %v1551
        %v1818 = vpop.f32.mrf.mxu0
        %v1819 = vadd.f32 0.0, %v1818
        %v1820 = vpop.f32.mrf.mxu0
        %v1821 = vadd.f32 0.0, %v1820
        %1822 = vmatmul.bf16.gmra.mxu0 %v1553
        %v1823 = vpop.f32.mrf.mxu0
        %v1824 = vadd.f32 0.0, %v1823
        %v1825 = vpop.f32.mrf.mxu0
        %v1826 = vadd.f32 0.0, %v1825
        %1827 = vmatmul.bf16.gmra.mxu0 %v1555
        %v1828 = vpop.f32.mrf.mxu0
        %v1829 = vadd.f32 0.0, %v1828
        %v1830 = vpop.f32.mrf.mxu0
        %v1831 = vadd.f32 0.0, %v1830
        %1832 = vmatmul.bf16.gmra.mxu0 %v1557
        %v1833 = vpop.f32.mrf.mxu0
        %v1834 = vadd.f32 0.0, %v1833
        %v1835 = vpop.f32.mrf.mxu0
        %v1836 = vadd.f32 0.0, %v1835
        %1837 = vdwg.mxu0
        %1838 = vmatpush.bf16.msra.mxu0 %v1718
        %1839 = vmatpush.bf16.msra.mxu0 %v1716
        %1840 = vmatpush.bf16.msra.mxu0 %v1714
        %1841 = vmatpush.bf16.msra.mxu0 %v1712
        %1842 = vmatpush.bf16.msra.mxu0 %v1710
        %1843 = vmatpush.bf16.msra.mxu0 %v1708
        %1844 = vmatpush.bf16.msra.mxu0 %v1706
        %1845 = vmatpush.bf16.msra.mxu0 %v1704
        %1846 = vmatmul.bf16.gmra.mxu0 %v1552
        %v1847 = vpop.f32.mrf.mxu0
        %v1848 = vadd.f32 %v1819, %v1847
        %v1849 = vpop.f32.mrf.mxu0
        %v1850 = vadd.f32 %v1821, %v1849
        %1851 = vmatmul.bf16.gmra.mxu0 %v1554
        %v1852 = vpop.f32.mrf.mxu0
        %v1853 = vadd.f32 %v1824, %v1852
        %v1854 = vpop.f32.mrf.mxu0
        %v1855 = vadd.f32 %v1826, %v1854
        %1856 = vmatmul.bf16.gmra.mxu0 %v1556
        %v1857 = vpop.f32.mrf.mxu0
        %v1858 = vadd.f32 %v1829, %v1857
        %v1859 = vpop.f32.mrf.mxu0
        %v1860 = vadd.f32 %v1831, %v1859
        %1861 = vmatmul.bf16.gmra.mxu0 %v1558
        %v1862 = vpop.f32.mrf.mxu0
        %v1863 = vadd.f32 %v1834, %v1862
        %v1864 = vpop.f32.mrf.mxu0
        %v1865 = vadd.f32 %v1836, %v1864
        %1866 = vdwg.mxu0
        %v1867 = vadd.f32 %v1535, %v1790
        %v1868 = vadd.f32 %v1536, %v1848
        %v1869 = vadd.f32 %v1537, %v1792
        %v1870 = vadd.f32 %v1538, %v1850
        %v1871 = vadd.f32 %v1539, %v1795
        %v1872 = vadd.f32 %v1540, %v1853
        %v1873 = vadd.f32 %v1541, %v1797
        %v1874 = vadd.f32 %v1542, %v1855
        %v1875 = vadd.f32 %v1543, %v1800
        %v1876 = vadd.f32 %v1544, %v1858
        %v1877 = vadd.f32 %v1545, %v1802
        %v1878 = vadd.f32 %v1546, %v1860
        %v1879 = vadd.f32 %v1547, %v1805
        %v1880 = vadd.f32 %v1548, %v1863
        %v1881 = vadd.f32 %v1549, %v1807
        %v1882 = vadd.f32 %v1550, %v1865
        %1883 = vst [vmem:[#allocation2] sm:$0xff] %v1867
        %1884 = vst [vmem:[#allocation2 + $0x8] sm:$0xff] %v1868
        %1885 = vst [vmem:[#allocation2 + $0x10] sm:$0xff] %v1869
        %1886 = vst [vmem:[#allocation2 + $0x18] sm:$0xff] %v1870
        %1887 = vst [vmem:[#allocation2 + $0x20] sm:$0xff] %v1871
        %1888 = vst [vmem:[#allocation2 + $0x28] sm:$0xff] %v1872
        %1889 = vst [vmem:[#allocation2 + $0x30] sm:$0xff] %v1873
        %1890 = vst [vmem:[#allocation2 + $0x38] sm:$0xff] %v1874
        %1891 = vst [vmem:[#allocation2 + $0x40] sm:$0xff] %v1875
        %1892 = vst [vmem:[#allocation2 + $0x48] sm:$0xff] %v1876
        %1893 = vst [vmem:[#allocation2 + $0x50] sm:$0xff] %v1877
        %1894 = vst [vmem:[#allocation2 + $0x58] sm:$0xff] %v1878
        %1895 = vst [vmem:[#allocation2 + $0x60] sm:$0xff] %v1879
        %1896 = vst [vmem:[#allocation2 + $0x68] sm:$0xff] %v1880
        %1897 = vst [vmem:[#allocation2 + $0x70] sm:$0xff] %v1881
        %1898 = vst [vmem:[#allocation2 + $0x78] sm:$0xff] %v1882
        %p1899 = scmp.eq.s32.totalorder %s23, 1
        // Predicated region
        $region129: #{netg2_forward.1} parent=115 // pred_check
          %p1900 = pneg %p1899
        $region130: #{netg2_forward.1} parent=115 // pred_check_branch
          %1902 = sbr.rel (%p1900) target = $region132
        $region131: #{netg2_forward.1} parent=115 // pred_region
          %v1903 = vld [vmem:[#allocation2] sm:$0xff]
          %v1904 = vld [vmem:[#allocation2 + $0x8] sm:$0xff]
          %v1905 = vld [vmem:[#allocation2 + $0x10] sm:$0xff]
          %v1906 = vld [vmem:[#allocation2 + $0x18] sm:$0xff]
          %v1907 = vld [vmem:[#allocation2 + $0x20] sm:$0xff]
          %v1908 = vld [vmem:[#allocation2 + $0x28] sm:$0xff]
          %v1909 = vld [vmem:[#allocation2 + $0x30] sm:$0xff]
          %v1910 = vld [vmem:[#allocation2 + $0x38] sm:$0xff]
          %v1911 = vld [vmem:[#allocation2 + $0x40] sm:$0xff]
          %v1912 = vld [vmem:[#allocation2 + $0x48] sm:$0xff]
          %v1913 = vld [vmem:[#allocation2 + $0x50] sm:$0xff]
          %v1914 = vld [vmem:[#allocation2 + $0x58] sm:$0xff]
          %v1915 = vld [vmem:[#allocation2 + $0x60] sm:$0xff]
          %v1916 = vld [vmem:[#allocation2 + $0x68] sm:$0xff]
          %v1917 = vld [vmem:[#allocation2 + $0x70] sm:$0xff]
          %v1918 = vld [vmem:[#allocation2 + $0x78] sm:$0xff]
          %v1919 = vld [vmem:[%s6] sm:$0x3]
          %v1920 = vunpack.c.l.bf16 %v1919
          %v1922 = vperm.slane %v1920, 0
          %v1923 = vperm.slane %v1920, 2
          %v1926 = vperm.slane %v1922, 0
          %v1927 = vperm.slane %v1923, 0
          %v1928 = vadd.f32 %v1903, %v1926
          %v1929 = vadd.f32 %v1904, %v1927
          %v1930 = vadd.f32 %v1905, %v1926
          %v1931 = vadd.f32 %v1906, %v1927
          %v1932 = vadd.f32 %v1907, %v1926
          %v1933 = vadd.f32 %v1908, %v1927
          %v1934 = vadd.f32 %v1909, %v1926
          %v1935 = vadd.f32 %v1910, %v1927
          %v1936 = vadd.f32 %v1911, %v1926
          %v1937 = vadd.f32 %v1912, %v1927
          %v1938 = vadd.f32 %v1913, %v1926
          %v1939 = vadd.f32 %v1914, %v1927
          %v1940 = vadd.f32 %v1915, %v1926
          %v1941 = vadd.f32 %v1916, %v1927
          %v1942 = vadd.f32 %v1917, %v1926
          %v1943 = vadd.f32 %v1918, %v1927
          %1944 = vst [vmem:[%s713] sm:$0xff] %v1928
          %1945 = vst [vmem:[%s713 + $0x8] sm:$0xff] %v1929
          %1946 = vst [vmem:[%s713 + $0x10] sm:$0xff] %v1930
          %1947 = vst [vmem:[%s713 + $0x18] sm:$0xff] %v1931
          %1948 = vst [vmem:[%s713 + $0x20] sm:$0xff] %v1932
          %1949 = vst [vmem:[%s713 + $0x28] sm:$0xff] %v1933
          %1950 = vst [vmem:[%s713 + $0x30] sm:$0xff] %v1934
          %1951 = vst [vmem:[%s713 + $0x38] sm:$0xff] %v1935
          %1952 = vst [vmem:[%s713 + $0x40] sm:$0xff] %v1936
          %1953 = vst [vmem:[%s713 + $0x48] sm:$0xff] %v1937
          %1954 = vst [vmem:[%s713 + $0x50] sm:$0xff] %v1938
          %1955 = vst [vmem:[%s713 + $0x58] sm:$0xff] %v1939
          %1956 = vst [vmem:[%s713 + $0x60] sm:$0xff] %v1940
          %1957 = vst [vmem:[%s713 + $0x68] sm:$0xff] %v1941
          %1958 = vst [vmem:[%s713 + $0x70] sm:$0xff] %v1942
          %1959 = vst [vmem:[%s713 + $0x78] sm:$0xff] %v1943
        $region132: #{netg2_forward.1} parent=115 // pred_fallthru
          _
        %s1960 = smul.u32 8, %s22
        %p1961 = scmp.lt.s32.totalorder %s1960, 15
        %s1962 = scalar_select %p1961, %s1960, 15
        %s1963 = smul.addr %s1962, 2
        %s1964 = smul.addr %s1963, 8
        %s1965 = scalar_lea.vmem %s7, %s1964
        // Predicated region
        $region133: #{netg2_forward.1} parent=115 // pred_check
          %p1966 = pneg %p225
        $region134: #{netg2_forward.1} parent=115 // pred_check_branch
          %1968 = sbr.rel (%p1966) target = $region136
        $region135: #{netg2_forward.1} parent=115 // pred_region
          %s1969 = smul.u32 8, %s22
        $region136: #{netg2_forward.1} parent=115 // pred_fallthru
          _
      $region116: #{netg2_forward.1} parent=5 // pred_fallthru
        _
      %p1970 = scmp.le.s32.totalorder 2, %s13
      // Predicated region
      $region137: #{netg2_forward.1} parent=5 // pred_check
        %p1971 = pneg %p1970
      $region138: #{netg2_forward.1} parent=5 // pred_check_branch
        %1973 = sbr.rel (%p1971) target = $region140
      $region139: #{netg2_forward.1} parent=5 // pred_region
        %s1974 = ssub.s32 %s13, 2
        // Predicated region
        $region141: #{netg2_forward.1} parent=139 // pred_check
          %p1975 = pneg %p231
        $region142: #{netg2_forward.1} parent=139 // pred_check_branch
          %1977 = sbr.rel (%p1975) target = $region144
        $region143: #{netg2_forward.1} parent=139 // pred_region
          %s1978 = smul.u32 8, %s24
          %p1979 = scmp.lt.s32.totalorder %s1978, 15
          %s1980 = scalar_select %p1979, %s1978, 15
          %s1981 = smul.addr %s1980, 2
          %s1982 = smul.addr %s1981, 8
          %s1983 = scalar_lea.vmem %s7, %s1982
        $region144: #{netg2_forward.1} parent=139 // pred_fallthru
          _
      $region140: #{netg2_forward.1} parent=5 // pred_fallthru
        _
    $region6: #{netg2_forward.1} parent=1 // loop_footer
      %s17 = sadd.s32 1, %s13
    $region7: #{netg2_forward.1} parent=1 // loop_footer_branch
      %12 = sbr.rel target = $region3
    $region8: #{netg2_forward.1} parent=1 // loop_exit
      _

</llo_original>
